<compile_context>
chip_gen: v6e
topology: v6e:2x2x1
jax: 0.10.0
libtpu: 0.0.40
codegen_flags: <defaults>
</compile_context>

<pallas_src>
import jax
import jax.numpy as jnp
from jax.experimental import pallas as pl
from jax.experimental.pallas import tpu as pltpu


def _round_up(x, m):
    return (x + m - 1) // m * m


def _make_kernel(H, W, pad, C_in, cpg, KH, KW, HW_wide, HW_out, eps):
    Wp = W + 2 * pad
    KT = KH * KW
    HW = H * W
    inv_cnt = 1.0 / float(cpg * HW)

    def kernel(x_ref, w_ref, mask_ref, gamma_ref, beta_ref, o_ref,
               xpad_ref, rhs_ref):
        # ---- Build padded sample + stacked conv RHS once per sample --------
        # Grid is (N, G) with the group axis innermost ("arbitrary"); the
        # stacked RHS is shared by all groups of the sample, so only build it
        # at g == 0.  Scratch persists across grid steps.
        @pl.when(pl.program_id(1) == 0)
        def _build_rhs():
            # zero-pad inside VMEM (no jnp.pad HBM pass in the wrapper)
            xpad_ref[...] = jnp.zeros_like(xpad_ref)
            for h in range(H):
                base = (h + pad) * Wp + pad
                xpad_ref[:, base:base + W] = x_ref[0, :, h * W:(h + 1) * W]
            # stack the KT shifted views -> single K = KT*C_in contraction
            for t in range(KT):
                dy, dx = divmod(t, KW)
                off = dy * Wp + dx
                rhs_ref[t * C_in:(t + 1) * C_in, :] = xpad_ref[:, off:off + HW_wide]

        # ---- Conv for this (sample, group): ONE MXU matmul ------------------
        conv = jnp.dot(w_ref[0], rhs_ref[...],
                       preferred_element_type=jnp.float32)      # (cpg, HW_wide)

        # ---- GroupNorm statistics (two-pass; whole group is resident) -------
        mask = mask_ref[...]                                     # (1, HW_wide)
        s1 = jnp.sum(jnp.sum(conv * mask, axis=1, keepdims=True),
                     axis=0, keepdims=True)                      # (1, 1)
        mean = s1 * inv_cnt
        d = (conv - mean) * mask
        var = jnp.sum(jnp.sum(d * d, axis=1, keepdims=True),
                      axis=0, keepdims=True) * inv_cnt
        rstd = jax.lax.rsqrt(var + eps)                          # (1, 1)

        # ---- affine + ReLU ---------------------------------------------------
        scale = gamma_ref[0] * rstd                              # (cpg, 1)
        shift = beta_ref[0] - mean * scale                       # (cpg, 1)
        y = jnp.maximum(conv * scale + shift, 0.0).astype(o_ref.dtype)

        # ---- store compact H*W rows (drop the Wp-W pad columns in VMEM) -----
        for h in range(H):
            o_ref[0, 0, :, h * W:(h + 1) * W] = y[:, h * Wp:h * Wp + W]
        if HW_out > HW:
            o_ref[0, 0, :, HW:] = jnp.zeros((cpg, HW_out - HW), o_ref.dtype)

    return kernel


def conv_bn_relu(x_nchw, weight_oihw, gamma, beta, *, stride=1, pad=1,
                 gn_group=4, eps=1e-5, matmul_dtype=jnp.bfloat16):
    """Forward of ConvBnReLU. x_nchw: (N, C_in, H, W) float32 -> (N, C_out, H, W)."""
    assert stride == 1, "this wrapper implements the default stride=1 path"
    N, C_in, H, W = x_nchw.shape
    C_out, C_in_w, KH, KW = weight_oihw.shape
    assert C_in_w == C_in and C_out % gn_group == 0
    assert KH == 2 * pad + 1 and KW == 2 * pad + 1, "'same'-output path only"

    G = gn_group
    cpg = C_out // G
    Hp, Wp = H + 2 * pad, W + 2 * pad
    KT = KH * KW
    KTC = KT * C_in
    HW = H * W
    HW_wide = _round_up(H * Wp, 128)                  # matmul lane width (128-dense)
    HW_out = _round_up(HW, 128)                       # output lane width (== HW here)
    max_off = (KH - 1) * Wp + (KW - 1)
    Lx = _round_up(max(Hp * Wp, max_off + HW_wide), 128)

    # ---- glue (plain JAX, metadata-only reshapes; no pad / im2col in HBM) ----
    x_flat = x_nchw.reshape(N, C_in, HW).astype(matmul_dtype)
    w_g = (jnp.transpose(weight_oihw, (0, 2, 3, 1))   # (C_out, KH, KW, C_in)
           .reshape(G, cpg, KTC).astype(matmul_dtype))
    gamma_g = gamma.reshape(G, cpg, 1).astype(jnp.float32)
    beta_g = beta.reshape(G, cpg, 1).astype(jnp.float32)
    col = jnp.arange(HW_wide)
    mask = (((col % Wp) < W) & (col < H * Wp)).astype(jnp.float32).reshape(1, HW_wide)

    kernel = _make_kernel(H, W, pad, C_in, cpg, KH, KW, HW_wide, HW_out, eps)

    isz = jnp.dtype(matmul_dtype).itemsize
    vmem_bytes = (2 * C_in * HW * isz                 # x block (double-buffered)
                  + 2 * (cpg * KTC * isz + 2 * cpg * 4 + HW_wide * 4)
                  + 2 * cpg * HW_out * 4              # out block (double-buffered)
                  + C_in * Lx * isz                   # padded-sample scratch
                  + KTC * HW_wide * isz)              # stacked RHS scratch
    vmem_limit = int(min(max(4 * vmem_bytes, 16 * 1024 * 1024), 96 * 1024 * 1024))

    cost = pl.CostEstimate(
        flops=int(2 * N * C_out * KTC * HW_wide + 6 * N * C_out * HW_wide),
        transcendentals=int(N * G),
        bytes_accessed=int(x_flat.size * isz + w_g.size * isz
                           + N * C_out * HW_out * 4),
    )

    out = pl.pallas_call(
        kernel,
        out_shape=jax.ShapeDtypeStruct((N, G, cpg, HW_out), jnp.float32),
        grid=(N, G),
        in_specs=[
            pl.BlockSpec((1, C_in, HW), lambda n, g: (n, 0, 0)),    # unpadded sample
            pl.BlockSpec((1, cpg, KTC), lambda n, g: (g, 0, 0)),    # group weights
            pl.BlockSpec((1, HW_wide), lambda n, g: (0, 0)),        # valid-col mask
            pl.BlockSpec((1, cpg, 1), lambda n, g: (g, 0, 0)),      # gamma (group)
            pl.BlockSpec((1, cpg, 1), lambda n, g: (g, 0, 0)),      # beta (group)
        ],
        out_specs=pl.BlockSpec((1, 1, cpg, HW_out), lambda n, g: (n, g, 0, 0)),
        scratch_shapes=[
            pltpu.VMEM((C_in, Lx), matmul_dtype),      # zero-padded sample
            pltpu.VMEM((KTC, HW_wide), matmul_dtype),  # stacked conv RHS
        ],
        compiler_params=pltpu.CompilerParams(
            dimension_semantics=("parallel", "arbitrary"),
            vmem_limit_bytes=vmem_limit),
        cost_estimate=cost,
    )(x_flat, w_g, mask, gamma_g, beta_g)

    out = out.reshape(N, C_out, HW_out)
    if HW_out != HW:                                  # not taken at these shapes
        out = out[:, :, :HW]
    return out.reshape(N, C_out, H, W)


def _reference(x, w, gamma, beta, gn_group, eps=1e-5):
    N, C_in, H, W = x.shape
    C_out = w.shape[0]
    conv = jax.lax.conv_general_dilated(
        x, w, window_strides=(1, 1), padding=((1, 1), (1, 1)),
        dimension_numbers=('NCHW', 'OIHW', 'NCHW'))
    xr = conv.reshape(N, gn_group, -1)
    mean = xr.mean(-1, keepdims=True)
    var = xr.var(-1, keepdims=True)
    norm = ((xr - mean) / jnp.sqrt(var + eps)).reshape(N, C_out, H, W)
    y = norm * gamma[None, :, None, None] + beta[None, :, None, None]
    return jnp.maximum(y, 0.0)


if __name__ == "__main__":
    key = jax.random.PRNGKey(0)
    k_x, k_w, k_g, k_b = jax.random.split(key, 4)

    N, C_in, H, W = 2, 4, 16, 16
    C_out, K, G = 8, 3, 4

    x = jax.random.normal(k_x, (N, C_in, H, W), jnp.float32)
    weight = jax.random.normal(k_w, (C_out, C_in, K, K), jnp.float32) * 0.1
    gamma = 1.0 + 0.1 * jax.random.normal(k_g, (C_out,), jnp.float32)
    beta = 0.1 * jax.random.normal(k_b, (C_out,), jnp.float32)

    ref = _reference(x, weight, gamma, beta, G)

    # f32 MXU operands: tight check against the reference.
    out_f32 = conv_bn_relu(x, weight, gamma, beta, stride=1, pad=1, gn_group=G,
                           matmul_dtype=jnp.float32)
    out_f32 = jax.block_until_ready(out_f32)
    assert out_f32.shape == (N, C_out, H, W)
    assert jnp.allclose(out_f32, ref, atol=1e-4, rtol=1e-4), "f32 mismatch vs reference"

    # default bf16 MXU operands (recommended on v5e/v6e): f32 accumulation + stats.
    out_bf16 = conv_bn_relu(x, weight, gamma, beta, stride=1, pad=1, gn_group=G)
    out_bf16 = jax.block_until_ready(out_bf16)
    assert out_bf16.shape == (N, C_out, H, W)
    assert jnp.allclose(out_bf16, ref, atol=5e-2, rtol=5e-2), "bf16 mismatch vs reference"

    print("KERNEL_OK")
</pallas_src>

<mosaic_0001>
module attributes {stable_mosaic.version = 11 : i64} {
  func.func @kernel(%arg0: i32, %arg1: i32, %arg2: memref<1x4x256xf32, #tpu.memory_space<vmem>>, %arg3: memref<1x2x36xf32, #tpu.memory_space<vmem>>, %arg4: memref<1x384xf32, #tpu.memory_space<vmem>>, %arg5: memref<1x2x1xf32, #tpu.memory_space<vmem>>, %arg6: memref<1x2x1xf32, #tpu.memory_space<vmem>>, %arg7: memref<1x1x2x256xf32, #tpu.memory_space<vmem>>, %arg8: memref<4x512xf32, #tpu.memory_space<vmem>>, %arg9: memref<36x384xf32, #tpu.memory_space<vmem>>) attributes {dimension_semantics = [#tpu.dimension_semantics<parallel>, #tpu.dimension_semantics<arbitrary>], iteration_bounds = array<i64: 2, 4>, scalar_prefetch = 0 : i64, scratch_operands = 2 : i64, tpu.core_type = #tpu.core_type<tc>, window_params = [{transform_indices = @transform_0, window_bounds = array<i64: 1, 4, 256>}, {transform_indices = @transform_1, window_bounds = array<i64: 1, 2, 36>}, {pipeline_mode = #tpu.pipeline_mode<synchronous>, transform_indices = @transform_2, window_bounds = array<i64: 1, 384>}, {transform_indices = @transform_3, window_bounds = array<i64: 1, 2, 1>}, {transform_indices = @transform_4, window_bounds = array<i64: 1, 2, 1>}, {transform_indices = @transform_5, window_bounds = array<i64: 1, 1, 2, 256>}]} {
    %c0_i32 = arith.constant 0 : i32
    %0 = arith.cmpi eq, %arg1, %c0_i32 : i32
    %1 = arith.extui %0 : i1 to i32
    %c0_i32_0 = arith.constant 0 : i32
    %2 = arith.cmpi ne, %1, %c0_i32_0 : i32
    scf.if %2 {
      %cst_70 = arith.constant 0.000000e+00 : f32
      %109 = vector.broadcast %cst_70 : f32 to vector<4x512xf32>
      %c0_71 = arith.constant 0 : index
      %c0_72 = arith.constant 0 : index
      %110 = vector.load %arg8[%c0_71, %c0_72] : memref<4x512xf32, #tpu.memory_space<vmem>>, vector<4x512xf32>
      tpu.vector_store %arg8[%c0_71, %c0_72], %109 {strides = array<i32>} : memref<4x512xf32, #tpu.memory_space<vmem>>, vector<4x512xf32>,
      %c0_73 = arith.constant 0 : index
      %c0_74 = arith.constant 0 : index
      %c0_75 = arith.constant 0 : index
      %111 = vector.load %arg2[%c0_73, %c0_74, %c0_75] : memref<1x4x256xf32, #tpu.memory_space<vmem>>, vector<1x4x16xf32>
      %112 = vector.shape_cast %111 : vector<1x4x16xf32> to vector<4x16xf32>
      %c0_76 = arith.constant 0 : index
      %c19 = arith.constant 19 : index
      %113 = vector.load %arg8[%c0_76, %c19] : memref<4x512xf32, #tpu.memory_space<vmem>>, vector<4x16xf32>
      tpu.vector_store %arg8[%c0_76, %c19], %112 {strides = array<i32>} : memref<4x512xf32, #tpu.memory_space<vmem>>, vector<4x16xf32>,
      %c0_77 = arith.constant 0 : index
      %c0_78 = arith.constant 0 : index
      %c16_79 = arith.constant 16 : index
      %114 = vector.load %arg2[%c0_77, %c0_78, %c16_79] : memref<1x4x256xf32, #tpu.memory_space<vmem>>, vector<1x4x16xf32>
      %115 = vector.shape_cast %114 : vector<1x4x16xf32> to vector<4x16xf32>
      %c0_80 = arith.constant 0 : index
      %c37 = arith.constant 37 : index
      %116 = vector.load %arg8[%c0_80, %c37] : memref<4x512xf32, #tpu.memory_space<vmem>>, vector<4x16xf32>
      tpu.vector_store %arg8[%c0_80, %c37], %115 {strides = array<i32>} : memref<4x512xf32, #tpu.memory_space<vmem>>, vector<4x16xf32>,
      %c0_81 = arith.constant 0 : index
      %c0_82 = arith.constant 0 : index
      %c32_83 = arith.constant 32 : index
      %117 = vector.load %arg2[%c0_81, %c0_82, %c32_83] : memref<1x4x256xf32, #tpu.memory_space<vmem>>, vector<1x4x16xf32>
      %118 = vector.shape_cast %117 : vector<1x4x16xf32> to vector<4x16xf32>
      %c0_84 = arith.constant 0 : index
      %c55 = arith.constant 55 : index
      %119 = vector.load %arg8[%c0_84, %c55] : memref<4x512xf32, #tpu.memory_space<vmem>>, vector<4x16xf32>
      tpu.vector_store %arg8[%c0_84, %c55], %118 {strides = array<i32>} : memref<4x512xf32, #tpu.memory_space<vmem>>, vector<4x16xf32>,
      %c0_85 = arith.constant 0 : index
      %c0_86 = arith.constant 0 : index
      %c48_87 = arith.constant 48 : index
      %120 = vector.load %arg2[%c0_85, %c0_86, %c48_87] : memref<1x4x256xf32, #tpu.memory_space<vmem>>, vector<1x4x16xf32>
      %121 = vector.shape_cast %120 : vector<1x4x16xf32> to vector<4x16xf32>
      %c0_88 = arith.constant 0 : index
      %c73 = arith.constant 73 : index
      %122 = vector.load %arg8[%c0_88, %c73] : memref<4x512xf32, #tpu.memory_space<vmem>>, vector<4x16xf32>
      tpu.vector_store %arg8[%c0_88, %c73], %121 {strides = array<i32>} : memref<4x512xf32, #tpu.memory_space<vmem>>, vector<4x16xf32>,
      %c0_89 = arith.constant 0 : index
      %c0_90 = arith.constant 0 : index
      %c64_91 = arith.constant 64 : index
      %123 = vector.load %arg2[%c0_89, %c0_90, %c64_91] : memref<1x4x256xf32, #tpu.memory_space<vmem>>, vector<1x4x16xf32>
      %124 = vector.shape_cast %123 : vector<1x4x16xf32> to vector<4x16xf32>
      %c0_92 = arith.constant 0 : index
      %c91 = arith.constant 91 : index
      %125 = vector.load %arg8[%c0_92, %c91] : memref<4x512xf32, #tpu.memory_space<vmem>>, vector<4x16xf32>
      tpu.vector_store %arg8[%c0_92, %c91], %124 {strides = array<i32>} : memref<4x512xf32, #tpu.memory_space<vmem>>, vector<4x16xf32>,
      %c0_93 = arith.constant 0 : index
      %c0_94 = arith.constant 0 : index
      %c80_95 = arith.constant 80 : index
      %126 = vector.load %arg2[%c0_93, %c0_94, %c80_95] : memref<1x4x256xf32, #tpu.memory_space<vmem>>, vector<1x4x16xf32>
      %127 = vector.shape_cast %126 : vector<1x4x16xf32> to vector<4x16xf32>
      %c0_96 = arith.constant 0 : index
      %c109 = arith.constant 109 : index
      %128 = vector.load %arg8[%c0_96, %c109] : memref<4x512xf32, #tpu.memory_space<vmem>>, vector<4x16xf32>
      tpu.vector_store %arg8[%c0_96, %c109], %127 {strides = array<i32>} : memref<4x512xf32, #tpu.memory_space<vmem>>, vector<4x16xf32>,
      %c0_97 = arith.constant 0 : index
      %c0_98 = arith.constant 0 : index
      %c96_99 = arith.constant 96 : index
      %129 = vector.load %arg2[%c0_97, %c0_98, %c96_99] : memref<1x4x256xf32, #tpu.memory_space<vmem>>, vector<1x4x16xf32>
      %130 = vector.shape_cast %129 : vector<1x4x16xf32> to vector<4x16xf32>
      %c0_100 = arith.constant 0 : index
      %c127 = arith.constant 127 : index
      %131 = vector.load %arg8[%c0_100, %c127] : memref<4x512xf32, #tpu.memory_space<vmem>>, vector<4x16xf32>
      tpu.vector_store %arg8[%c0_100, %c127], %130 {strides = array<i32>} : memref<4x512xf32, #tpu.memory_space<vmem>>, vector<4x16xf32>,
      %c0_101 = arith.constant 0 : index
      %c0_102 = arith.constant 0 : index
      %c112_103 = arith.constant 112 : index
      %132 = vector.load %arg2[%c0_101, %c0_102, %c112_103] : memref<1x4x256xf32, #tpu.memory_space<vmem>>, vector<1x4x16xf32>
      %133 = vector.shape_cast %132 : vector<1x4x16xf32> to vector<4x16xf32>
      %c0_104 = arith.constant 0 : index
      %c145 = arith.constant 145 : index
      %134 = vector.load %arg8[%c0_104, %c145] : memref<4x512xf32, #tpu.memory_space<vmem>>, vector<4x16xf32>
      tpu.vector_store %arg8[%c0_104, %c145], %133 {strides = array<i32>} : memref<4x512xf32, #tpu.memory_space<vmem>>, vector<4x16xf32>,
      %c0_105 = arith.constant 0 : index
      %c0_106 = arith.constant 0 : index
      %c128_107 = arith.constant 128 : index
      %135 = vector.load %arg2[%c0_105, %c0_106, %c128_107] : memref<1x4x256xf32, #tpu.memory_space<vmem>>, vector<1x4x16xf32>
      %136 = vector.shape_cast %135 : vector<1x4x16xf32> to vector<4x16xf32>
      %c0_108 = arith.constant 0 : index
      %c163 = arith.constant 163 : index
      %137 = vector.load %arg8[%c0_108, %c163] : memref<4x512xf32, #tpu.memory_space<vmem>>, vector<4x16xf32>
      tpu.vector_store %arg8[%c0_108, %c163], %136 {strides = array<i32>} : memref<4x512xf32, #tpu.memory_space<vmem>>, vector<4x16xf32>,
      %c0_109 = arith.constant 0 : index
      %c0_110 = arith.constant 0 : index
      %c144_111 = arith.constant 144 : index
      %138 = vector.load %arg2[%c0_109, %c0_110, %c144_111] : memref<1x4x256xf32, #tpu.memory_space<vmem>>, vector<1x4x16xf32>
      %139 = vector.shape_cast %138 : vector<1x4x16xf32> to vector<4x16xf32>
      %c0_112 = arith.constant 0 : index
      %c181 = arith.constant 181 : index
      %140 = vector.load %arg8[%c0_112, %c181] : memref<4x512xf32, #tpu.memory_space<vmem>>, vector<4x16xf32>
      tpu.vector_store %arg8[%c0_112, %c181], %139 {strides = array<i32>} : memref<4x512xf32, #tpu.memory_space<vmem>>, vector<4x16xf32>,
      %c0_113 = arith.constant 0 : index
      %c0_114 = arith.constant 0 : index
      %c160_115 = arith.constant 160 : index
      %141 = vector.load %arg2[%c0_113, %c0_114, %c160_115] : memref<1x4x256xf32, #tpu.memory_space<vmem>>, vector<1x4x16xf32>
      %142 = vector.shape_cast %141 : vector<1x4x16xf32> to vector<4x16xf32>
      %c0_116 = arith.constant 0 : index
      %c199 = arith.constant 199 : index
      %143 = vector.load %arg8[%c0_116, %c199] : memref<4x512xf32, #tpu.memory_space<vmem>>, vector<4x16xf32>
      tpu.vector_store %arg8[%c0_116, %c199], %142 {strides = array<i32>} : memref<4x512xf32, #tpu.memory_space<vmem>>, vector<4x16xf32>,
      %c0_117 = arith.constant 0 : index
      %c0_118 = arith.constant 0 : index
      %c176_119 = arith.constant 176 : index
      %144 = vector.load %arg2[%c0_117, %c0_118, %c176_119] : memref<1x4x256xf32, #tpu.memory_space<vmem>>, vector<1x4x16xf32>
      %145 = vector.shape_cast %144 : vector<1x4x16xf32> to vector<4x16xf32>
      %c0_120 = arith.constant 0 : index
      %c217 = arith.constant 217 : index
      %146 = vector.load %arg8[%c0_120, %c217] : memref<4x512xf32, #tpu.memory_space<vmem>>, vector<4x16xf32>
      tpu.vector_store %arg8[%c0_120, %c217], %145 {strides = array<i32>} : memref<4x512xf32, #tpu.memory_space<vmem>>, vector<4x16xf32>,
      %c0_121 = arith.constant 0 : index
      %c0_122 = arith.constant 0 : index
      %c192_123 = arith.constant 192 : index
      %147 = vector.load %arg2[%c0_121, %c0_122, %c192_123] : memref<1x4x256xf32, #tpu.memory_space<vmem>>, vector<1x4x16xf32>
      %148 = vector.shape_cast %147 : vector<1x4x16xf32> to vector<4x16xf32>
      %c0_124 = arith.constant 0 : index
      %c235 = arith.constant 235 : index
      %149 = vector.load %arg8[%c0_124, %c235] : memref<4x512xf32, #tpu.memory_space<vmem>>, vector<4x16xf32>
      tpu.vector_store %arg8[%c0_124, %c235], %148 {strides = array<i32>} : memref<4x512xf32, #tpu.memory_space<vmem>>, vector<4x16xf32>,
      %c0_125 = arith.constant 0 : index
      %c0_126 = arith.constant 0 : index
      %c208_127 = arith.constant 208 : index
      %150 = vector.load %arg2[%c0_125, %c0_126, %c208_127] : memref<1x4x256xf32, #tpu.memory_space<vmem>>, vector<1x4x16xf32>
      %151 = vector.shape_cast %150 : vector<1x4x16xf32> to vector<4x16xf32>
      %c0_128 = arith.constant 0 : index
      %c253 = arith.constant 253 : index
      %152 = vector.load %arg8[%c0_128, %c253] : memref<4x512xf32, #tpu.memory_space<vmem>>, vector<4x16xf32>
      tpu.vector_store %arg8[%c0_128, %c253], %151 {strides = array<i32>} : memref<4x512xf32, #tpu.memory_space<vmem>>, vector<4x16xf32>,
      %c0_129 = arith.constant 0 : index
      %c0_130 = arith.constant 0 : index
      %c224_131 = arith.constant 224 : index
      %153 = vector.load %arg2[%c0_129, %c0_130, %c224_131] : memref<1x4x256xf32, #tpu.memory_space<vmem>>, vector<1x4x16xf32>
      %154 = vector.shape_cast %153 : vector<1x4x16xf32> to vector<4x16xf32>
      %c0_132 = arith.constant 0 : index
      %c271 = arith.constant 271 : index
      %155 = vector.load %arg8[%c0_132, %c271] : memref<4x512xf32, #tpu.memory_space<vmem>>, vector<4x16xf32>
      tpu.vector_store %arg8[%c0_132, %c271], %154 {strides = array<i32>} : memref<4x512xf32, #tpu.memory_space<vmem>>, vector<4x16xf32>,
      %c0_133 = arith.constant 0 : index
      %c0_134 = arith.constant 0 : index
      %c240_135 = arith.constant 240 : index
      %156 = vector.load %arg2[%c0_133, %c0_134, %c240_135] : memref<1x4x256xf32, #tpu.memory_space<vmem>>, vector<1x4x16xf32>
      %157 = vector.shape_cast %156 : vector<1x4x16xf32> to vector<4x16xf32>
      %c0_136 = arith.constant 0 : index
      %c289 = arith.constant 289 : index
      %158 = vector.load %arg8[%c0_136, %c289] : memref<4x512xf32, #tpu.memory_space<vmem>>, vector<4x16xf32>
      tpu.vector_store %arg8[%c0_136, %c289], %157 {strides = array<i32>} : memref<4x512xf32, #tpu.memory_space<vmem>>, vector<4x16xf32>,
      %c0_137 = arith.constant 0 : index
      %c0_138 = arith.constant 0 : index
      %159 = vector.load %arg8[%c0_137, %c0_138] : memref<4x512xf32, #tpu.memory_space<vmem>>, vector<4x384xf32>
      %c0_139 = arith.constant 0 : index
      %c0_140 = arith.constant 0 : index
      %160 = vector.load %arg9[%c0_139, %c0_140] : memref<36x384xf32, #tpu.memory_space<vmem>>, vector<4x384xf32>
      tpu.vector_store %arg9[%c0_139, %c0_140], %159 {strides = array<i32>} : memref<36x384xf32, #tpu.memory_space<vmem>>, vector<4x384xf32>,
      %c0_141 = arith.constant 0 : index
      %c1 = arith.constant 1 : index
      %161 = vector.load %arg8[%c0_141, %c1] : memref<4x512xf32, #tpu.memory_space<vmem>>, vector<4x384xf32>
      %c4 = arith.constant 4 : index
      %c0_142 = arith.constant 0 : index
      %162 = vector.load %arg9[%c4, %c0_142] : memref<36x384xf32, #tpu.memory_space<vmem>>, vector<4x384xf32>
      tpu.vector_store %arg9[%c4, %c0_142], %161 {strides = array<i32>} : memref<36x384xf32, #tpu.memory_space<vmem>>, vector<4x384xf32>,
      %c0_143 = arith.constant 0 : index
      %c2 = arith.constant 2 : index
      %163 = vector.load %arg8[%c0_143, %c2] : memref<4x512xf32, #tpu.memory_space<vmem>>, vector<4x384xf32>
      %c8 = arith.constant 8 : index
      %c0_144 = arith.constant 0 : index
      %164 = vector.load %arg9[%c8, %c0_144] : memref<36x384xf32, #tpu.memory_space<vmem>>, vector<4x384xf32>
      tpu.vector_store %arg9[%c8, %c0_144], %163 {strides = array<i32>} : memref<36x384xf32, #tpu.memory_space<vmem>>, vector<4x384xf32>,
      %c0_145 = arith.constant 0 : index
      %c18 = arith.constant 18 : index
      %165 = vector.load %arg8[%c0_145, %c18] : memref<4x512xf32, #tpu.memory_space<vmem>>, vector<4x384xf32>
      %c12 = arith.constant 12 : index
      %c0_146 = arith.constant 0 : index
      %166 = vector.load %arg9[%c12, %c0_146] : memref<36x384xf32, #tpu.memory_space<vmem>>, vector<4x384xf32>
      tpu.vector_store %arg9[%c12, %c0_146], %165 {strides = array<i32>} : memref<36x384xf32, #tpu.memory_space<vmem>>, vector<4x384xf32>,
      %c0_147 = arith.constant 0 : index
      %c19_148 = arith.constant 19 : index
      %167 = vector.load %arg8[%c0_147, %c19_148] : memref<4x512xf32, #tpu.memory_space<vmem>>, vector<4x384xf32>
      %c16_149 = arith.constant 16 : index
      %c0_150 = arith.constant 0 : index
      %168 = vector.load %arg9[%c16_149, %c0_150] : memref<36x384xf32, #tpu.memory_space<vmem>>, vector<4x384xf32>
      tpu.vector_store %arg9[%c16_149, %c0_150], %167 {strides = array<i32>} : memref<36x384xf32, #tpu.memory_space<vmem>>, vector<4x384xf32>,
      %c0_151 = arith.constant 0 : index
      %c20 = arith.constant 20 : index
      %169 = vector.load %arg8[%c0_151, %c20] : memref<4x512xf32, #tpu.memory_space<vmem>>, vector<4x384xf32>
      %c20_152 = arith.constant 20 : index
      %c0_153 = arith.constant 0 : index
      %170 = vector.load %arg9[%c20_152, %c0_153] : memref<36x384xf32, #tpu.memory_space<vmem>>, vector<4x384xf32>
      tpu.vector_store %arg9[%c20_152, %c0_153], %169 {strides = array<i32>} : memref<36x384xf32, #tpu.memory_space<vmem>>, vector<4x384xf32>,
      %c0_154 = arith.constant 0 : index
      %c36 = arith.constant 36 : index
      %171 = vector.load %arg8[%c0_154, %c36] : memref<4x512xf32, #tpu.memory_space<vmem>>, vector<4x384xf32>
      %c24 = arith.constant 24 : index
      %c0_155 = arith.constant 0 : index
      %172 = vector.load %arg9[%c24, %c0_155] : memref<36x384xf32, #tpu.memory_space<vmem>>, vector<4x384xf32>
      tpu.vector_store %arg9[%c24, %c0_155], %171 {strides = array<i32>} : memref<36x384xf32, #tpu.memory_space<vmem>>, vector<4x384xf32>,
      %c0_156 = arith.constant 0 : index
      %c37_157 = arith.constant 37 : index
      %173 = vector.load %arg8[%c0_156, %c37_157] : memref<4x512xf32, #tpu.memory_space<vmem>>, vector<4x384xf32>
      %c28 = arith.constant 28 : index
      %c0_158 = arith.constant 0 : index
      %174 = vector.load %arg9[%c28, %c0_158] : memref<36x384xf32, #tpu.memory_space<vmem>>, vector<4x384xf32>
      tpu.vector_store %arg9[%c28, %c0_158], %173 {strides = array<i32>} : memref<36x384xf32, #tpu.memory_space<vmem>>, vector<4x384xf32>,
      %c0_159 = arith.constant 0 : index
      %c38 = arith.constant 38 : index
      %175 = vector.load %arg8[%c0_159, %c38] : memref<4x512xf32, #tpu.memory_space<vmem>>, vector<4x384xf32>
      %c32_160 = arith.constant 32 : index
      %c0_161 = arith.constant 0 : index
      %176 = vector.load %arg9[%c32_160, %c0_161] : memref<36x384xf32, #tpu.memory_space<vmem>>, vector<4x384xf32>
      tpu.vector_store %arg9[%c32_160, %c0_161], %175 {strides = array<i32>} : memref<36x384xf32, #tpu.memory_space<vmem>>, vector<4x384xf32>,
    } else {
    }
    %c0 = arith.constant 0 : index
    %c0_1 = arith.constant 0 : index
    %c0_2 = arith.constant 0 : index
    %3 = vector.load %arg3[%c0, %c0_1, %c0_2] : memref<1x2x36xf32, #tpu.memory_space<vmem>>, vector<1x2x36xf32>
    %4 = vector.shape_cast %3 : vector<1x2x36xf32> to vector<2x36xf32>
    %c0_3 = arith.constant 0 : index
    %c0_4 = arith.constant 0 : index
    %5 = vector.load %arg9[%c0_3, %c0_4] : memref<36x384xf32, #tpu.memory_space<vmem>>, vector<36x384xf32>
    %cst = arith.constant dense<0.000000e+00> : vector<2x384xf32>
    %6 = tpu.matmul %4, %5, %cst {dimension_numbers = #tpu.dot_dimension_numbers<[1], [0], [0], [1], [0, 0, 1, 1], [], []>} : vector<2x36xf32>, vector<36x384xf32>, vector<2x384xf32> -> vector<2x384xf32>
    %c0_5 = arith.constant 0 : index
    %c0_6 = arith.constant 0 : index
    %7 = vector.load %arg4[%c0_5, %c0_6] : memref<1x384xf32, #tpu.memory_space<vmem>>, vector<1x384xf32>
    %8 = vector.broadcast %7 : vector<1x384xf32> to vector<2x384xf32>
    %9 = arith.mulf %6, %8 : vector<2x384xf32>
    %cst_7 = arith.constant dense<0.000000e+00> : vector<2xf32>
    %10 = vector.multi_reduction <add>, %9, %cst_7 [1] : vector<2x384xf32> to vector<2xf32>
    %11 = vector.shape_cast %10 : vector<2xf32> to vector<2x1xf32>
    %cst_8 = arith.constant dense<0.000000e+00> : vector<1xf32>
    %12 = vector.multi_reduction <add>, %11, %cst_8 [0] : vector<2x1xf32> to vector<1xf32>
    %13 = vector.shape_cast %12 : vector<1xf32> to vector<1x1xf32>
    %cst_9 = arith.constant 0.001953125 : f32
    %14 = vector.broadcast %cst_9 : f32 to vector<1x1xf32>
    %15 = arith.mulf %13, %14 : vector<1x1xf32>
    %16 = vector.broadcast %15 : vector<1x1xf32> to vector<2x384xf32>
    %17 = arith.subf %6, %16 : vector<2x384xf32>
    %18 = vector.broadcast %7 : vector<1x384xf32> to vector<2x384xf32>
    %19 = arith.mulf %17, %18 : vector<2x384xf32>
    %20 = arith.mulf %19, %19 : vector<2x384xf32>
    %cst_10 = arith.constant dense<0.000000e+00> : vector<2xf32>
    %21 = vector.multi_reduction <add>, %20, %cst_10 [1] : vector<2x384xf32> to vector<2xf32>
    %22 = vector.shape_cast %21 : vector<2xf32> to vector<2x1xf32>
    %cst_11 = arith.constant dense<0.000000e+00> : vector<1xf32>
    %23 = vector.multi_reduction <add>, %22, %cst_11 [0] : vector<2x1xf32> to vector<1xf32>
    %24 = vector.shape_cast %23 : vector<1xf32> to vector<1x1xf32>
    %cst_12 = arith.constant 0.001953125 : f32
    %25 = vector.broadcast %cst_12 : f32 to vector<1x1xf32>
    %26 = arith.mulf %24, %25 : vector<1x1xf32>
    %cst_13 = arith.constant 9.99999974E-6 : f32
    %27 = vector.broadcast %cst_13 : f32 to vector<1x1xf32>
    %28 = arith.addf %26, %27 : vector<1x1xf32>
    %29 = math.rsqrt %28 : vector<1x1xf32>
    %c0_14 = arith.constant 0 : index
    %c0_15 = arith.constant 0 : index
    %c0_16 = arith.constant 0 : index
    %30 = vector.load %arg5[%c0_14, %c0_15, %c0_16] : memref<1x2x1xf32, #tpu.memory_space<vmem>>, vector<1x2x1xf32>
    %31 = vector.shape_cast %30 : vector<1x2x1xf32> to vector<2x1xf32>
    %32 = vector.broadcast %29 : vector<1x1xf32> to vector<2x1xf32>
    %33 = arith.mulf %31, %32 : vector<2x1xf32>
    %c0_17 = arith.constant 0 : index
    %c0_18 = arith.constant 0 : index
    %c0_19 = arith.constant 0 : index
    %34 = vector.load %arg6[%c0_17, %c0_18, %c0_19] : memref<1x2x1xf32, #tpu.memory_space<vmem>>, vector<1x2x1xf32>
    %35 = vector.shape_cast %34 : vector<1x2x1xf32> to vector<2x1xf32>
    %36 = vector.broadcast %15 : vector<1x1xf32> to vector<2x1xf32>
    %37 = arith.mulf %36, %33 : vector<2x1xf32>
    %38 = arith.subf %35, %37 : vector<2x1xf32>
    %39 = vector.broadcast %33 : vector<2x1xf32> to vector<2x384xf32>
    %40 = arith.mulf %6, %39 : vector<2x384xf32>
    %41 = vector.broadcast %38 : vector<2x1xf32> to vector<2x384xf32>
    %42 = arith.addf %40, %41 : vector<2x384xf32>
    %cst_20 = arith.constant 0.000000e+00 : f32
    %43 = vector.broadcast %cst_20 : f32 to vector<2x384xf32>
    %44 = arith.maximumf %42, %43 : vector<2x384xf32>
    %45 = vector.extract_strided_slice %44 {offsets = [0, 0], sizes = [2, 16], strides = [1, 1]} : vector<2x384xf32> to vector<2x16xf32>
    %c0_21 = arith.constant 0 : index
    %c0_22 = arith.constant 0 : index
    %c0_23 = arith.constant 0 : index
    %c0_24 = arith.constant 0 : index
    %46 = vector.load %arg7[%c0_21, %c0_22, %c0_23, %c0_24] : memref<1x1x2x256xf32, #tpu.memory_space<vmem>>, vector<1x1x2x16xf32>
    %47 = vector.shape_cast %46 : vector<1x1x2x16xf32> to vector<2x16xf32>
    %48 = vector.shape_cast %45 : vector<2x16xf32> to vector<1x1x2x16xf32>
    tpu.vector_store %arg7[%c0_21, %c0_22, %c0_23, %c0_24], %48 {strides = array<i32>} : memref<1x1x2x256xf32, #tpu.memory_space<vmem>>, vector<1x1x2x16xf32>,
    %49 = vector.extract_strided_slice %44 {offsets = [0, 18], sizes = [2, 16], strides = [1, 1]} : vector<2x384xf32> to vector<2x16xf32>
    %c0_25 = arith.constant 0 : index
    %c0_26 = arith.constant 0 : index
    %c0_27 = arith.constant 0 : index
    %c16 = arith.constant 16 : index
    %50 = vector.load %arg7[%c0_25, %c0_26, %c0_27, %c16] : memref<1x1x2x256xf32, #tpu.memory_space<vmem>>, vector<1x1x2x16xf32>
    %51 = vector.shape_cast %50 : vector<1x1x2x16xf32> to vector<2x16xf32>
    %52 = vector.shape_cast %49 : vector<2x16xf32> to vector<1x1x2x16xf32>
    tpu.vector_store %arg7[%c0_25, %c0_26, %c0_27, %c16], %52 {strides = array<i32>} : memref<1x1x2x256xf32, #tpu.memory_space<vmem>>, vector<1x1x2x16xf32>,
    %53 = vector.extract_strided_slice %44 {offsets = [0, 36], sizes = [2, 16], strides = [1, 1]} : vector<2x384xf32> to vector<2x16xf32>
    %c0_28 = arith.constant 0 : index
    %c0_29 = arith.constant 0 : index
    %c0_30 = arith.constant 0 : index
    %c32 = arith.constant 32 : index
    %54 = vector.load %arg7[%c0_28, %c0_29, %c0_30, %c32] : memref<1x1x2x256xf32, #tpu.memory_space<vmem>>, vector<1x1x2x16xf32>
    %55 = vector.shape_cast %54 : vector<1x1x2x16xf32> to vector<2x16xf32>
    %56 = vector.shape_cast %53 : vector<2x16xf32> to vector<1x1x2x16xf32>
    tpu.vector_store %arg7[%c0_28, %c0_29, %c0_30, %c32], %56 {strides = array<i32>} : memref<1x1x2x256xf32, #tpu.memory_space<vmem>>, vector<1x1x2x16xf32>,
    %57 = vector.extract_strided_slice %44 {offsets = [0, 54], sizes = [2, 16], strides = [1, 1]} : vector<2x384xf32> to vector<2x16xf32>
    %c0_31 = arith.constant 0 : index
    %c0_32 = arith.constant 0 : index
    %c0_33 = arith.constant 0 : index
    %c48 = arith.constant 48 : index
    %58 = vector.load %arg7[%c0_31, %c0_32, %c0_33, %c48] : memref<1x1x2x256xf32, #tpu.memory_space<vmem>>, vector<1x1x2x16xf32>
    %59 = vector.shape_cast %58 : vector<1x1x2x16xf32> to vector<2x16xf32>
    %60 = vector.shape_cast %57 : vector<2x16xf32> to vector<1x1x2x16xf32>
    tpu.vector_store %arg7[%c0_31, %c0_32, %c0_33, %c48], %60 {strides = array<i32>} : memref<1x1x2x256xf32, #tpu.memory_space<vmem>>, vector<1x1x2x16xf32>,
    %61 = vector.extract_strided_slice %44 {offsets = [0, 72], sizes = [2, 16], strides = [1, 1]} : vector<2x384xf32> to vector<2x16xf32>
    %c0_34 = arith.constant 0 : index
    %c0_35 = arith.constant 0 : index
    %c0_36 = arith.constant 0 : index
    %c64 = arith.constant 64 : index
    %62 = vector.load %arg7[%c0_34, %c0_35, %c0_36, %c64] : memref<1x1x2x256xf32, #tpu.memory_space<vmem>>, vector<1x1x2x16xf32>
    %63 = vector.shape_cast %62 : vector<1x1x2x16xf32> to vector<2x16xf32>
    %64 = vector.shape_cast %61 : vector<2x16xf32> to vector<1x1x2x16xf32>
    tpu.vector_store %arg7[%c0_34, %c0_35, %c0_36, %c64], %64 {strides = array<i32>} : memref<1x1x2x256xf32, #tpu.memory_space<vmem>>, vector<1x1x2x16xf32>,
    %65 = vector.extract_strided_slice %44 {offsets = [0, 90], sizes = [2, 16], strides = [1, 1]} : vector<2x384xf32> to vector<2x16xf32>
    %c0_37 = arith.constant 0 : index
    %c0_38 = arith.constant 0 : index
    %c0_39 = arith.constant 0 : index
    %c80 = arith.constant 80 : index
    %66 = vector.load %arg7[%c0_37, %c0_38, %c0_39, %c80] : memref<1x1x2x256xf32, #tpu.memory_space<vmem>>, vector<1x1x2x16xf32>
    %67 = vector.shape_cast %66 : vector<1x1x2x16xf32> to vector<2x16xf32>
    %68 = vector.shape_cast %65 : vector<2x16xf32> to vector<1x1x2x16xf32>
    tpu.vector_store %arg7[%c0_37, %c0_38, %c0_39, %c80], %68 {strides = array<i32>} : memref<1x1x2x256xf32, #tpu.memory_space<vmem>>, vector<1x1x2x16xf32>,
    %69 = vector.extract_strided_slice %44 {offsets = [0, 108], sizes = [2, 16], strides = [1, 1]} : vector<2x384xf32> to vector<2x16xf32>
    %c0_40 = arith.constant 0 : index
    %c0_41 = arith.constant 0 : index
    %c0_42 = arith.constant 0 : index
    %c96 = arith.constant 96 : index
    %70 = vector.load %arg7[%c0_40, %c0_41, %c0_42, %c96] : memref<1x1x2x256xf32, #tpu.memory_space<vmem>>, vector<1x1x2x16xf32>
    %71 = vector.shape_cast %70 : vector<1x1x2x16xf32> to vector<2x16xf32>
    %72 = vector.shape_cast %69 : vector<2x16xf32> to vector<1x1x2x16xf32>
    tpu.vector_store %arg7[%c0_40, %c0_41, %c0_42, %c96], %72 {strides = array<i32>} : memref<1x1x2x256xf32, #tpu.memory_space<vmem>>, vector<1x1x2x16xf32>,
    %73 = vector.extract_strided_slice %44 {offsets = [0, 126], sizes = [2, 16], strides = [1, 1]} : vector<2x384xf32> to vector<2x16xf32>
    %c0_43 = arith.constant 0 : index
    %c0_44 = arith.constant 0 : index
    %c0_45 = arith.constant 0 : index
    %c112 = arith.constant 112 : index
    %74 = vector.load %arg7[%c0_43, %c0_44, %c0_45, %c112] : memref<1x1x2x256xf32, #tpu.memory_space<vmem>>, vector<1x1x2x16xf32>
    %75 = vector.shape_cast %74 : vector<1x1x2x16xf32> to vector<2x16xf32>
    %76 = vector.shape_cast %73 : vector<2x16xf32> to vector<1x1x2x16xf32>
    tpu.vector_store %arg7[%c0_43, %c0_44, %c0_45, %c112], %76 {strides = array<i32>} : memref<1x1x2x256xf32, #tpu.memory_space<vmem>>, vector<1x1x2x16xf32>,
    %77 = vector.extract_strided_slice %44 {offsets = [0, 144], sizes = [2, 16], strides = [1, 1]} : vector<2x384xf32> to vector<2x16xf32>
    %c0_46 = arith.constant 0 : index
    %c0_47 = arith.constant 0 : index
    %c0_48 = arith.constant 0 : index
    %c128 = arith.constant 128 : index
    %78 = vector.load %arg7[%c0_46, %c0_47, %c0_48, %c128] : memref<1x1x2x256xf32, #tpu.memory_space<vmem>>, vector<1x1x2x16xf32>
    %79 = vector.shape_cast %78 : vector<1x1x2x16xf32> to vector<2x16xf32>
    %80 = vector.shape_cast %77 : vector<2x16xf32> to vector<1x1x2x16xf32>
    tpu.vector_store %arg7[%c0_46, %c0_47, %c0_48, %c128], %80 {strides = array<i32>} : memref<1x1x2x256xf32, #tpu.memory_space<vmem>>, vector<1x1x2x16xf32>,
    %81 = vector.extract_strided_slice %44 {offsets = [0, 162], sizes = [2, 16], strides = [1, 1]} : vector<2x384xf32> to vector<2x16xf32>
    %c0_49 = arith.constant 0 : index
    %c0_50 = arith.constant 0 : index
    %c0_51 = arith.constant 0 : index
    %c144 = arith.constant 144 : index
    %82 = vector.load %arg7[%c0_49, %c0_50, %c0_51, %c144] : memref<1x1x2x256xf32, #tpu.memory_space<vmem>>, vector<1x1x2x16xf32>
    %83 = vector.shape_cast %82 : vector<1x1x2x16xf32> to vector<2x16xf32>
    %84 = vector.shape_cast %81 : vector<2x16xf32> to vector<1x1x2x16xf32>
    tpu.vector_store %arg7[%c0_49, %c0_50, %c0_51, %c144], %84 {strides = array<i32>} : memref<1x1x2x256xf32, #tpu.memory_space<vmem>>, vector<1x1x2x16xf32>,
    %85 = vector.extract_strided_slice %44 {offsets = [0, 180], sizes = [2, 16], strides = [1, 1]} : vector<2x384xf32> to vector<2x16xf32>
    %c0_52 = arith.constant 0 : index
    %c0_53 = arith.constant 0 : index
    %c0_54 = arith.constant 0 : index
    %c160 = arith.constant 160 : index
    %86 = vector.load %arg7[%c0_52, %c0_53, %c0_54, %c160] : memref<1x1x2x256xf32, #tpu.memory_space<vmem>>, vector<1x1x2x16xf32>
    %87 = vector.shape_cast %86 : vector<1x1x2x16xf32> to vector<2x16xf32>
    %88 = vector.shape_cast %85 : vector<2x16xf32> to vector<1x1x2x16xf32>
    tpu.vector_store %arg7[%c0_52, %c0_53, %c0_54, %c160], %88 {strides = array<i32>} : memref<1x1x2x256xf32, #tpu.memory_space<vmem>>, vector<1x1x2x16xf32>,
    %89 = vector.extract_strided_slice %44 {offsets = [0, 198], sizes = [2, 16], strides = [1, 1]} : vector<2x384xf32> to vector<2x16xf32>
    %c0_55 = arith.constant 0 : index
    %c0_56 = arith.constant 0 : index
    %c0_57 = arith.constant 0 : index
    %c176 = arith.constant 176 : index
    %90 = vector.load %arg7[%c0_55, %c0_56, %c0_57, %c176] : memref<1x1x2x256xf32, #tpu.memory_space<vmem>>, vector<1x1x2x16xf32>
    %91 = vector.shape_cast %90 : vector<1x1x2x16xf32> to vector<2x16xf32>
    %92 = vector.shape_cast %89 : vector<2x16xf32> to vector<1x1x2x16xf32>
    tpu.vector_store %arg7[%c0_55, %c0_56, %c0_57, %c176], %92 {strides = array<i32>} : memref<1x1x2x256xf32, #tpu.memory_space<vmem>>, vector<1x1x2x16xf32>,
    %93 = vector.extract_strided_slice %44 {offsets = [0, 216], sizes = [2, 16], strides = [1, 1]} : vector<2x384xf32> to vector<2x16xf32>
    %c0_58 = arith.constant 0 : index
    %c0_59 = arith.constant 0 : index
    %c0_60 = arith.constant 0 : index
    %c192 = arith.constant 192 : index
    %94 = vector.load %arg7[%c0_58, %c0_59, %c0_60, %c192] : memref<1x1x2x256xf32, #tpu.memory_space<vmem>>, vector<1x1x2x16xf32>
    %95 = vector.shape_cast %94 : vector<1x1x2x16xf32> to vector<2x16xf32>
    %96 = vector.shape_cast %93 : vector<2x16xf32> to vector<1x1x2x16xf32>
    tpu.vector_store %arg7[%c0_58, %c0_59, %c0_60, %c192], %96 {strides = array<i32>} : memref<1x1x2x256xf32, #tpu.memory_space<vmem>>, vector<1x1x2x16xf32>,
    %97 = vector.extract_strided_slice %44 {offsets = [0, 234], sizes = [2, 16], strides = [1, 1]} : vector<2x384xf32> to vector<2x16xf32>
    %c0_61 = arith.constant 0 : index
    %c0_62 = arith.constant 0 : index
    %c0_63 = arith.constant 0 : index
    %c208 = arith.constant 208 : index
    %98 = vector.load %arg7[%c0_61, %c0_62, %c0_63, %c208] : memref<1x1x2x256xf32, #tpu.memory_space<vmem>>, vector<1x1x2x16xf32>
    %99 = vector.shape_cast %98 : vector<1x1x2x16xf32> to vector<2x16xf32>
    %100 = vector.shape_cast %97 : vector<2x16xf32> to vector<1x1x2x16xf32>
    tpu.vector_store %arg7[%c0_61, %c0_62, %c0_63, %c208], %100 {strides = array<i32>} : memref<1x1x2x256xf32, #tpu.memory_space<vmem>>, vector<1x1x2x16xf32>,
    %101 = vector.extract_strided_slice %44 {offsets = [0, 252], sizes = [2, 16], strides = [1, 1]} : vector<2x384xf32> to vector<2x16xf32>
    %c0_64 = arith.constant 0 : index
    %c0_65 = arith.constant 0 : index
    %c0_66 = arith.constant 0 : index
    %c224 = arith.constant 224 : index
    %102 = vector.load %arg7[%c0_64, %c0_65, %c0_66, %c224] : memref<1x1x2x256xf32, #tpu.memory_space<vmem>>, vector<1x1x2x16xf32>
    %103 = vector.shape_cast %102 : vector<1x1x2x16xf32> to vector<2x16xf32>
    %104 = vector.shape_cast %101 : vector<2x16xf32> to vector<1x1x2x16xf32>
    tpu.vector_store %arg7[%c0_64, %c0_65, %c0_66, %c224], %104 {strides = array<i32>} : memref<1x1x2x256xf32, #tpu.memory_space<vmem>>, vector<1x1x2x16xf32>,
    %105 = vector.extract_strided_slice %44 {offsets = [0, 270], sizes = [2, 16], strides = [1, 1]} : vector<2x384xf32> to vector<2x16xf32>
    %c0_67 = arith.constant 0 : index
    %c0_68 = arith.constant 0 : index
    %c0_69 = arith.constant 0 : index
    %c240 = arith.constant 240 : index
    %106 = vector.load %arg7[%c0_67, %c0_68, %c0_69, %c240] : memref<1x1x2x256xf32, #tpu.memory_space<vmem>>, vector<1x1x2x16xf32>
    %107 = vector.shape_cast %106 : vector<1x1x2x16xf32> to vector<2x16xf32>
    %108 = vector.shape_cast %105 : vector<2x16xf32> to vector<1x1x2x16xf32>
    tpu.vector_store %arg7[%c0_67, %c0_68, %c0_69, %c240], %108 {strides = array<i32>} : memref<1x1x2x256xf32, #tpu.memory_space<vmem>>, vector<1x1x2x16xf32>,
    return
  }
  func.func @transform_0(%arg0: i32, %arg1: i32) -> (i32, i32, i32) {
    %c0_i32 = arith.constant 0 : i32
    %c0_i32_0 = arith.constant 0 : i32
    %c0_i32_1 = arith.constant 0 : i32
    return %arg0, %c0_i32, %c0_i32_0 : i32, i32, i32
  }
  func.func @transform_1(%arg0: i32, %arg1: i32) -> (i32, i32, i32) {
    %c0_i32 = arith.constant 0 : i32
    %c0_i32_0 = arith.constant 0 : i32
    %c0_i32_1 = arith.constant 0 : i32
    return %arg1, %c0_i32, %c0_i32_0 : i32, i32, i32
  }
  func.func @transform_2(%arg0: i32, %arg1: i32) -> (i32, i32) {
    %c0_i32 = arith.constant 0 : i32
    %c0_i32_0 = arith.constant 0 : i32
    %c0_i32_1 = arith.constant 0 : i32
    return %c0_i32, %c0_i32_0 : i32, i32
  }
  func.func @transform_3(%arg0: i32, %arg1: i32) -> (i32, i32, i32) {
    %c0_i32 = arith.constant 0 : i32
    %c0_i32_0 = arith.constant 0 : i32
    %c0_i32_1 = arith.constant 0 : i32
    return %arg1, %c0_i32, %c0_i32_0 : i32, i32, i32
  }
  func.func @transform_4(%arg0: i32, %arg1: i32) -> (i32, i32, i32) {
    %c0_i32 = arith.constant 0 : i32
    %c0_i32_0 = arith.constant 0 : i32
    %c0_i32_1 = arith.constant 0 : i32
    return %arg1, %c0_i32, %c0_i32_0 : i32, i32, i32
  }
  func.func @transform_5(%arg0: i32, %arg1: i32) -> (i32, i32, i32, i32) {
    %c0_i32 = arith.constant 0 : i32
    %c0_i32_0 = arith.constant 0 : i32
    %c0_i32_1 = arith.constant 0 : i32
    return %arg0, %arg1, %c0_i32, %c0_i32_0 : i32, i32, i32, i32
  }
}

</mosaic_0001>

<llo_original>
// kernel: tpu_custom_call.1
$region0: #{tpu_custom_call.1}
  #allocation0 [shape = 'u32[]', space=smem, size = 0x4, offset = 0x4, fixed_abs, tag = 'smem constant byte address 0x4 - core index']
  #allocation1 [shape = 'u32[144,128]{1,0:T(1,128)}', space=vmem, size = 0x12000, scoped, tag = 'internal scratch']
  #allocation2 [shape = 'f32[4,512]{1,0:T(4,128)}', space=vmem, size = 0x2000, scoped, tag = 'scratch operand']
  #allocation3 [shape = 'f32[36,384]{1,0:T(8,128)}', space=vmem, size = 0xf000, scoped, tag = 'scratch operand']
  %s0 = inlined_call_operand.vmem [shape: f32[2,4,256], index: 0, kind: input, shape index: {}]
  %s1 = inlined_call_operand.hbm [shape: f32[4,2,36], index: 1, kind: input, shape index: {}]
  %s2 = inlined_call_operand.vmem [shape: f32[1,384], index: 2, kind: input, shape index: {}]
  %s3 = inlined_call_operand.vmem [shape: f32[4,2,1], index: 3, kind: input, shape index: {}]
  %s4 = inlined_call_operand.vmem [shape: f32[4,2,1], index: 4, kind: input, shape index: {}]
  %s5 = inlined_call_operand.hbm [shape: f32[2,4,2,256], index: 5, kind: output, shape index: {}]
  %s6 = sld [smem:[#allocation0]]
  $region61: #{tpu_custom_call.1} parent=0
    _
  %s8 = ssub.s32 1, %s6
  %s9 = scalar_select 0, %s8, %s6
  $region1: #{tpu_custom_call.1} parent=0
    #allocation4 [shape = 'u8[2048]{0}', space=vmem, size = 0x800, scoped, tag = 'input window, operand 1']
    #allocation5 [shape = 's32[2]{0}', space=sflag, size = 0x8, scoped, tag = 'scoped memory for tpu_custom_call.1']
    #allocation6 [shape = 's32[2]{0}', space=sflag, size = 0x8, scoped, tag = 'scoped memory for tpu_custom_call.1']
    #allocation7 [shape = 'u8[4096]{0}', space=vmem, size = 0x1000, scoped, tag = 'output window, operand 0']
    %10 = vsyncpa [#allocation5], 0
    %s11 = scalar_lea.sflag [#allocation5], 1
    %12 = vsyncpa %s11, 0
    %13 = vsyncpa [#allocation6], 0
    %s14 = scalar_lea.sflag [#allocation6], 1
    %15 = vsyncpa %s14, 0
    loop: start=0, step=1, limit=10
    $region2: #{tpu_custom_call.1} parent=1 // loop_pre_header
      _
    $region3: #{tpu_custom_call.1} parent=1 // loop_header
      %s17 = sphi 0, %s21
      %p18 = scmp.ge.s32.totalorder %s17, 10
      %s24 = sphi 0, %s36
      %s25 = sphi 0, %s32
      %s26 = sphi 0, %s24
      %s27 = sphi 0, %s25
      %s28 = sphi 0, %s26
      %s29 = sphi 0, %s27
      %s39 = sphi 0, %s41
      %s42 = sphi 0, %s39
      %s43 = sphi 0, %s42
      %s59 = sphi 0, %s43
      %s65 = sphi 0, %s67
      %s68 = sphi 0, %s65
      %s69 = sphi 0, %s68
      %s85 = sphi 0, %s69
      %s89 = sphi 0, %s89
      %s91 = sphi 0, %s89
      %s92 = sphi 0, %s91
      %s106 = sphi 0, %s92
      %s112 = sphi 0, %s114
      %s115 = sphi 0, %s112
      %s116 = sphi 0, %s115
      %s132 = sphi 0, %s116
      %s138 = sphi 0, %s140
      %s141 = sphi 0, %s138
      %s142 = sphi 0, %s141
      %s158 = sphi 0, %s142
      %s166 = sphi 0, %s168
      %s169 = sphi 0, %s166
      %s170 = sphi 0, %s169
      %s186 = sphi 0, %s170
    $region4: #{tpu_custom_call.1} parent=1 // loop_header_branch
      %20 = sbr.rel (%p18) target = $region8
    $region5: #{tpu_custom_call.1} parent=1 // loop_body
      %s22 = ssub.s32 %s17, 1
      %s23 = ssub.s32 %s17, 2
      %s30 = sadd.s32 1, %s25
      %p31 = scmp.ge.s32.totalorder %s30, 4
      %s32 = scalar_select %p31, 0, %s30
      %s33 = sadd.s32 1, %s24
      %s34 = scalar_select %p31, %s33, %s24
      %p35 = scmp.ge.s32.totalorder %s34, 2
      %s36 = scalar_select %p35, 0, %s34
      %s37 = ssub.s32 %s24, %s36
      %p38 = scmp.eq.s32.totalorder %s37, 0
      %s40 = sadd.s32 %s39, 1
      %s41 = scalar_select %p38, %s39, %s40
      %p44 = pneg %p38
      %p45 = scmp.eq.s32.totalorder %s17, 7
      %p46 = por %p44, %p45
      %p47 = scmp.ne.s32.totalorder %s39, %s42
      %p48 = scmp.eq.s32.totalorder %s17, 0
      %p49 = por %p47, %p48
      %p50 = scmp.ne.s32.totalorder %s39, %s42
      %p51 = scmp.eq.s32.totalorder %s22, 7
      %p52 = por %p50, %p51
      %p53 = scmp.ne.s32.totalorder %s42, %s43
      %p54 = scmp.eq.s32.totalorder %s22, 0
      %p55 = por %p53, %p54
      %p56 = scmp.ne.s32.totalorder %s42, %s43
      %p57 = scmp.eq.s32.totalorder %s23, 7
      %p58 = por %p56, %p57
      %p60 = scmp.ne.s32.totalorder %s43, %s59
      %p61 = scmp.eq.s32.totalorder %s23, 0
      %p62 = por %p60, %p61
      %s63 = ssub.s32 %s25, %s32
      %p64 = scmp.eq.s32.totalorder %s63, 0
      %s66 = sadd.s32 %s65, 1
      %s67 = scalar_select %p64, %s65, %s66
      %p70 = pneg %p64
      %p71 = scmp.eq.s32.totalorder %s17, 7
      %p72 = por %p70, %p71
      %p73 = scmp.ne.s32.totalorder %s65, %s68
      %p74 = scmp.eq.s32.totalorder %s17, 0
      %p75 = por %p73, %p74
      %p76 = scmp.ne.s32.totalorder %s65, %s68
      %p77 = scmp.eq.s32.totalorder %s22, 7
      %p78 = por %p76, %p77
      %p79 = scmp.ne.s32.totalorder %s68, %s69
      %p80 = scmp.eq.s32.totalorder %s22, 0
      %p81 = por %p79, %p80
      %p82 = scmp.ne.s32.totalorder %s68, %s69
      %p83 = scmp.eq.s32.totalorder %s23, 7
      %p84 = por %p82, %p83
      %p86 = scmp.ne.s32.totalorder %s69, %s85
      %p87 = scmp.eq.s32.totalorder %s23, 0
      %p88 = por %p86, %p87
      %s90 = sadd.s32 %s89, 1
      %p93 = scmp.eq.s32.totalorder %s17, 7
      %p94 = scmp.ne.s32.totalorder %s89, %s91
      %p95 = scmp.eq.s32.totalorder %s17, 0
      %p96 = por %p94, %p95
      %p97 = scmp.ne.s32.totalorder %s89, %s91
      %p98 = scmp.eq.s32.totalorder %s22, 7
      %p99 = por %p97, %p98
      %p100 = scmp.ne.s32.totalorder %s91, %s92
      %p101 = scmp.eq.s32.totalorder %s22, 0
      %p102 = por %p100, %p101
      %p103 = scmp.ne.s32.totalorder %s91, %s92
      %p104 = scmp.eq.s32.totalorder %s23, 7
      %p105 = por %p103, %p104
      %p107 = scmp.ne.s32.totalorder %s92, %s106
      %p108 = scmp.eq.s32.totalorder %s23, 0
      %p109 = por %p107, %p108
      %s110 = ssub.s32 %s25, %s32
      %p111 = scmp.eq.s32.totalorder %s110, 0
      %s113 = sadd.s32 %s112, 1
      %s114 = scalar_select %p111, %s112, %s113
      %p117 = pneg %p111
      %p118 = scmp.eq.s32.totalorder %s17, 7
      %p119 = por %p117, %p118
      %p120 = scmp.ne.s32.totalorder %s112, %s115
      %p121 = scmp.eq.s32.totalorder %s17, 0
      %p122 = por %p120, %p121
      %p123 = scmp.ne.s32.totalorder %s112, %s115
      %p124 = scmp.eq.s32.totalorder %s22, 7
      %p125 = por %p123, %p124
      %p126 = scmp.ne.s32.totalorder %s115, %s116
      %p127 = scmp.eq.s32.totalorder %s22, 0
      %p128 = por %p126, %p127
      %p129 = scmp.ne.s32.totalorder %s115, %s116
      %p130 = scmp.eq.s32.totalorder %s23, 7
      %p131 = por %p129, %p130
      %p133 = scmp.ne.s32.totalorder %s116, %s132
      %p134 = scmp.eq.s32.totalorder %s23, 0
      %p135 = por %p133, %p134
      %s136 = ssub.s32 %s25, %s32
      %p137 = scmp.eq.s32.totalorder %s136, 0
      %s139 = sadd.s32 %s138, 1
      %s140 = scalar_select %p137, %s138, %s139
      %p143 = pneg %p137
      %p144 = scmp.eq.s32.totalorder %s17, 7
      %p145 = por %p143, %p144
      %p146 = scmp.ne.s32.totalorder %s138, %s141
      %p147 = scmp.eq.s32.totalorder %s17, 0
      %p148 = por %p146, %p147
      %p149 = scmp.ne.s32.totalorder %s138, %s141
      %p150 = scmp.eq.s32.totalorder %s22, 7
      %p151 = por %p149, %p150
      %p152 = scmp.ne.s32.totalorder %s141, %s142
      %p153 = scmp.eq.s32.totalorder %s22, 0
      %p154 = por %p152, %p153
      %p155 = scmp.ne.s32.totalorder %s141, %s142
      %p156 = scmp.eq.s32.totalorder %s23, 7
      %p157 = por %p155, %p156
      %p159 = scmp.ne.s32.totalorder %s142, %s158
      %p160 = scmp.eq.s32.totalorder %s23, 0
      %p161 = por %p159, %p160
      %s162 = ssub.s32 %s24, %s36
      %s163 = ssub.s32 %s25, %s32
      %s164 = sor.u32 %s162, %s163
      %p165 = scmp.eq.s32.totalorder %s164, 0
      %s167 = sadd.s32 %s166, 1
      %s168 = scalar_select %p165, %s166, %s167
      %p171 = pneg %p165
      %p172 = scmp.eq.s32.totalorder %s17, 7
      %p173 = por %p171, %p172
      %p174 = scmp.ne.s32.totalorder %s166, %s169
      %p175 = scmp.eq.s32.totalorder %s17, 0
      %p176 = por %p174, %p175
      %p177 = scmp.ne.s32.totalorder %s166, %s169
      %p178 = scmp.eq.s32.totalorder %s22, 7
      %p179 = por %p177, %p178
      %p180 = scmp.ne.s32.totalorder %s169, %s170
      %p181 = scmp.eq.s32.totalorder %s22, 0
      %p182 = por %p180, %p181
      %p183 = scmp.ne.s32.totalorder %s169, %s170
      %p184 = scmp.eq.s32.totalorder %s23, 7
      %p185 = por %p183, %p184
      %p187 = scmp.ne.s32.totalorder %s170, %s186
      %p188 = scmp.eq.s32.totalorder %s23, 0
      %p189 = por %p187, %p188
      %p190 = scmp.le.s32.totalorder 1, %s17
      %p191 = scmp.lt.s32.totalorder %s17, 9
      %p192 = pnand %p190, %p191
      %p193 = pneg %p192
      // Predicated region
      $region9: #{tpu_custom_call.1} parent=5 // pred_check
        _
      $region10: #{tpu_custom_call.1} parent=5 // pred_check_branch
        %195 = sbr.rel (%p192) target = $region12
      $region11: #{tpu_custom_call.1} parent=5 // pred_region
        %s196 = ssub.s32 %s17, 1
        // Predicated region
        $region13: #{tpu_custom_call.1} parent=11 // pred_check
          %p197 = pneg %p102
        $region14: #{tpu_custom_call.1} parent=11 // pred_check_branch
          %199 = sbr.rel (%p197) target = $region16
        $region15: #{tpu_custom_call.1} parent=11 // pred_region
          _
        $region16: #{tpu_custom_call.1} parent=11 // pred_fallthru
          _
      $region12: #{tpu_custom_call.1} parent=5 // pred_fallthru
        _
      %p200 = scmp.lt.s32.totalorder %s17, 8
      // Predicated region
      $region17: #{tpu_custom_call.1} parent=5 // pred_check
        %p201 = pneg %p200
      $region18: #{tpu_custom_call.1} parent=5 // pred_check_branch
        %203 = sbr.rel (%p201) target = $region20
      $region19: #{tpu_custom_call.1} parent=5 // pred_region
        // Predicated region
        $region21: #{tpu_custom_call.1} parent=19 // pred_check
          %p204 = pneg %p49
        $region22: #{tpu_custom_call.1} parent=19 // pred_check_branch
          %206 = sbr.rel (%p204) target = $region24
        $region23: #{tpu_custom_call.1} parent=19 // pred_region
          %p207 = scmp.lt.s32.totalorder %s24, 1
          %s208 = scalar_select %p207, %s24, 1
          %s209 = smul.addr %s208, 2
          %s210 = smul.addr %s209, 4
          %s211 = scalar_lea.vmem %s0, %s210
        $region24: #{tpu_custom_call.1} parent=19 // pred_fallthru
          _
        // Predicated region
        $region25: #{tpu_custom_call.1} parent=19 // pred_check
          %p212 = pneg %p75
        $region26: #{tpu_custom_call.1} parent=19 // pred_check_branch
          %214 = sbr.rel (%p212) target = $region28
        $region27: #{tpu_custom_call.1} parent=19 // pred_region
          %s215 = sand.u32 %s65, 1
          %s216 = scalar_lea.sflag [#allocation5], %s215
          %s217 = sand.u32 %s65, 1
          %s218 = smul.addr %s217, 2
          %s219 = scalar_lea.vmem [#allocation4], %s218
          %s221 = ssub.s32 32, 32
          %222 = vsyncadd %s216, %s221
          %s223 = smul.addr %s25, 32
          %s224 = scalar_lea.hbm %s1, %s223
          %s226 = sshll.u32 %s219, 4
          %s227 = int_to_ptr.vmem [resolvable:$true] %s226
          %229 = dma.hbm_to_vmem [thread:$0]  %s224, 32, %s227, %s216
        $region28: #{tpu_custom_call.1} parent=19 // pred_fallthru
          _
        // Predicated region
        $region29: #{tpu_custom_call.1} parent=19 // pred_check
          %p230 = pneg %p122
        $region30: #{tpu_custom_call.1} parent=19 // pred_check_branch
          %232 = sbr.rel (%p230) target = $region32
        $region31: #{tpu_custom_call.1} parent=19 // pred_region
          %p233 = scmp.lt.s32.totalorder %s25, 3
          %s234 = scalar_select %p233, %s25, 3
          %s235 = smul.addr %s234, 2
          %s236 = scalar_lea.vmem %s3, %s235
        $region32: #{tpu_custom_call.1} parent=19 // pred_fallthru
          _
        // Predicated region
        $region33: #{tpu_custom_call.1} parent=19 // pred_check
          %p237 = pneg %p148
        $region34: #{tpu_custom_call.1} parent=19 // pred_check_branch
          %239 = sbr.rel (%p237) target = $region36
        $region35: #{tpu_custom_call.1} parent=19 // pred_region
          %p240 = scmp.lt.s32.totalorder %s25, 3
          %s241 = scalar_select %p240, %s25, 3
          %s242 = smul.addr %s241, 2
          %s243 = scalar_lea.vmem %s4, %s242
        $region36: #{tpu_custom_call.1} parent=19 // pred_fallthru
          _
      $region20: #{tpu_custom_call.1} parent=5 // pred_fallthru
        _
      %p244 = scmp.le.s32.totalorder 1, %s17
      %p245 = scmp.lt.s32.totalorder %s17, 9
      %p246 = pnand %p244, %p245
      %p247 = pneg %p246
      // Predicated region
      $region37: #{tpu_custom_call.1} parent=5 // pred_check
        _
      $region38: #{tpu_custom_call.1} parent=5 // pred_check_branch
        %249 = sbr.rel (%p246) target = $region40
      $region39: #{tpu_custom_call.1} parent=5 // pred_region
        %s250 = ssub.s32 %s17, 1
        %s251 = sand.u32 %s68, 1
        %s252 = scalar_lea.sflag [#allocation5], %s251
        %s253 = sand.u32 %s68, 1
        %s254 = smul.addr %s253, 2
        %s255 = scalar_lea.vmem [#allocation4], %s254
        // Predicated region
        $region41: #{tpu_custom_call.1} parent=39 // pred_check
          %p256 = pneg %p81
        $region42: #{tpu_custom_call.1} parent=39 // pred_check_branch
          %258 = sbr.rel (%p256) target = $region44
        $region43: #{tpu_custom_call.1} parent=39 // pred_region
          %259 = dma.done %s252, 32
        $region44: #{tpu_custom_call.1} parent=39 // pred_fallthru
          _
        %p260 = scmp.lt.s32.totalorder %s26, 1
        %s261 = scalar_select %p260, %s26, 1
        %s262 = smul.addr %s261, 2
        %s263 = smul.addr %s262, 4
        %s264 = scalar_lea.vmem %s0, %s263
        %p265 = pneg %p55
        %p266 = pneg %p52
        %s267 = sand.u32 %s68, 1
        %s268 = scalar_lea.sflag [#allocation5], %s267
        %s269 = sand.u32 %s68, 1
        %s270 = smul.addr %s269, 2
        %s271 = scalar_lea.vmem [#allocation4], %s270
        %p272 = pneg %p81
        %p273 = pneg %p78
        %p274 = pneg %p102
        %p275 = pneg %p99
        %p276 = scmp.lt.s32.totalorder %s27, 3
        %s277 = scalar_select %p276, %s27, 3
        %s278 = smul.addr %s277, 2
        %s279 = scalar_lea.vmem %s3, %s278
        %p280 = pneg %p128
        %p281 = pneg %p125
        %p282 = scmp.lt.s32.totalorder %s27, 3
        %s283 = scalar_select %p282, %s27, 3
        %s284 = smul.addr %s283, 2
        %s285 = scalar_lea.vmem %s4, %s284
        %p286 = pneg %p154
        %p287 = pneg %p151
        %p288 = pneg %p182
        %p289 = pneg %p179
        %s290 = sand.u32 %s169, 1
        %s291 = scalar_lea.sflag [#allocation6], %s290
        %s292 = sand.u32 %s169, 1
        %s293 = smul.addr %s292, 4
        %s294 = scalar_lea.vmem [#allocation7], %s293
        %p295 = scmp.lt.s32.totalorder %s26, 1
        %s296 = scalar_select %p295, %s26, 1
        %s297 = smul.addr %s296, 2
        %s298 = smul.addr %s297, 4
        %s299 = scalar_lea.vmem %s0, %s298
        %p300 = scmp.lt.s32.totalorder %s27, 3
        %s301 = scalar_select %p300, %s27, 3
        %s302 = smul.addr %s301, 2
        %s303 = scalar_lea.vmem %s3, %s302
        %p304 = scmp.lt.s32.totalorder %s27, 3
        %s305 = scalar_select %p304, %s27, 3
        %s306 = smul.addr %s305, 2
        %s307 = scalar_lea.vmem %s4, %s306
        %p308 = scmp.eq.s32.totalorder %s27, 0
        // Predicated region
        $region45: #{tpu_custom_call.1} parent=39 // pred_check
          %p309 = pneg %p308
        $region46: #{tpu_custom_call.1} parent=39 // pred_check_branch
          %311 = sbr.rel (%p309) target = $region48
        $region47: #{tpu_custom_call.1} parent=39 // pred_region
          %312 = vst [vmem:[#allocation2] sm:$0xff] 0.0
          %313 = vst [vmem:[#allocation2 + $0x8] sm:$0xff] 0.0
          %v314 = vld [vmem:[%s299] sm:$0xf]
          %316 = vrot.lane.b32.xlu0 %v314, 19
          %v317 = vpop.permute.xlu0 %316
          %vm319 = vcmask 281752
          %320 = vst.msk [vmem:[#allocation2] sm:$0xf] %vm319, %v317
          %v321 = vld [vmem:[%s299] sm:$0xf]
          %323 = vrot.lane.b32.xlu0 %v321, 21
          %v324 = vpop.permute.xlu0 %323
          %vm326 = vcmask 429352
          %327 = vst.msk [vmem:[#allocation2] sm:$0xf] %vm326, %v324
          %v328 = vld [vmem:[%s299] sm:$0xf]
          %330 = vrot.lane.b32.xlu0 %v328, 23
          %v331 = vpop.permute.xlu0 %330
          %vm333 = vcmask 576952
          %334 = vst.msk [vmem:[#allocation2] sm:$0xf] %vm333, %v331
          %v335 = vld [vmem:[%s299] sm:$0xf]
          %337 = vrot.lane.b32.xlu0 %v335, 25
          %v338 = vpop.permute.xlu0 %337
          %vm340 = vcmask 724552
          %341 = vst.msk [vmem:[#allocation2] sm:$0xf] %vm340, %v338
          %v342 = vld [vmem:[%s299] sm:$0xf]
          %344 = vrot.lane.b32.xlu0 %v342, 27
          %v345 = vpop.permute.xlu0 %344
          %vm347 = vcmask 872152
          %348 = vst.msk [vmem:[#allocation2] sm:$0xf] %vm347, %v345
          %v349 = vld [vmem:[%s299] sm:$0xf]
          %351 = vrot.lane.b32.xlu0 %v349, 29
          %v352 = vpop.permute.xlu0 %351
          %vm354 = vcmask 1019752
          %355 = vst.msk [vmem:[#allocation2] sm:$0xf] %vm354, %v352
          %v356 = vld [vmem:[%s299] sm:$0xf]
          %358 = vrot.lane.b32.xlu0 %v356, 31
          %v359 = vpop.permute.xlu0 %358
          %v360 = vrot.slane %v359, 4
          %vm361 = vcmask 252928
          %v362 = vsel %vm361, %v360, %v359
          %vm364 = vcmask 1044472
          %vm365 = vcmask 121860
          %vm366 = vmor %vm365, %vm364
          %367 = vst.msk [vmem:[#allocation2] sm:$0xff] %vm366, %v362
          %v368 = vld [vmem:[%s299] sm:$0xf]
          %370 = vrot.lane.b32.xlu0 %v368, 33
          %v371 = vpop.permute.xlu0 %370
          %vm373 = vcmask 265352
          %374 = vst.msk [vmem:[#allocation2 + $0x4] sm:$0xf] %vm373, %v371
          %v375 = vld [vmem:[%s299 + $0x4] sm:$0xf]
          %377 = vrot.lane.b32.xlu0 %v375, 35
          %v378 = vpop.permute.xlu0 %377
          %vm380 = vcmask 412952
          %381 = vst.msk [vmem:[#allocation2 + $0x4] sm:$0xf] %vm380, %v378
          %v382 = vld [vmem:[%s299 + $0x4] sm:$0xf]
          %384 = vrot.lane.b32.xlu0 %v382, 37
          %v385 = vpop.permute.xlu0 %384
          %vm387 = vcmask 560552
          %388 = vst.msk [vmem:[#allocation2 + $0x4] sm:$0xf] %vm387, %v385
          %v389 = vld [vmem:[%s299 + $0x4] sm:$0xf]
          %391 = vrot.lane.b32.xlu0 %v389, 39
          %v392 = vpop.permute.xlu0 %391
          %vm394 = vcmask 708152
          %395 = vst.msk [vmem:[#allocation2 + $0x4] sm:$0xf] %vm394, %v392
          %v396 = vld [vmem:[%s299 + $0x4] sm:$0xf]
          %398 = vrot.lane.b32.xlu0 %v396, 41
          %v399 = vpop.permute.xlu0 %398
          %vm401 = vcmask 855752
          %402 = vst.msk [vmem:[#allocation2 + $0x4] sm:$0xf] %vm401, %v399
          %v403 = vld [vmem:[%s299 + $0x4] sm:$0xf]
          %405 = vrot.lane.b32.xlu0 %v403, 43
          %v406 = vpop.permute.xlu0 %405
          %vm408 = vcmask 1003352
          %409 = vst.msk [vmem:[#allocation2 + $0x4] sm:$0xf] %vm408, %v406
          %v410 = vld [vmem:[%s299 + $0x4] sm:$0xf]
          %412 = vrot.lane.b32.xlu0 %v410, 45
          %v413 = vpop.permute.xlu0 %412
          %v414 = vrot.slane %v413, 4
          %vm415 = vcmask 367616
          %v416 = vsel %vm415, %v414, %v413
          %vm418 = vcmask 1044456
          %vm419 = vcmask 105476
          %vm420 = vmor %vm419, %vm418
          %421 = vst.msk [vmem:[#allocation2 + $0x4] sm:$0xff] %vm420, %v416
          %v422 = vld [vmem:[%s299 + $0x4] sm:$0xf]
          %424 = vrot.lane.b32.xlu0 %v422, 47
          %v425 = vpop.permute.xlu0 %424
          %vm427 = vcmask 248952
          %428 = vst.msk [vmem:[#allocation2 + $0x8] sm:$0xf] %vm427, %v425
          %v429 = vld [vmem:[%s299 + $0x4] sm:$0xf]
          %431 = vrot.lane.b32.xlu0 %v429, 49
          %v432 = vpop.permute.xlu0 %431
          %vm434 = vcmask 396552
          %435 = vst.msk [vmem:[#allocation2 + $0x8] sm:$0xf] %vm434, %v432
          %v436 = vld [vmem:[#allocation2] sm:$0xff]
          %v437 = vld [vmem:[#allocation2 + $0x8] sm:$0xf]
          %v439 = vcombine.high %v436, %v436
          %441 = vst [vmem:[#allocation3] sm:$0xf] %v436
          %442 = vst [vmem:[#allocation3 + $0x8] sm:$0xf] %v439
          %443 = vst [vmem:[#allocation3 + $0x10] sm:$0xf] %v437
          %v444 = vld [vmem:[#allocation2] sm:$0xff]
          %v445 = vld [vmem:[#allocation2 + $0x8] sm:$0xff]
          %v448 = vcombine.low %v444, %v444
          %v449 = vcombine.low %v445, %v445
          %450 = vrot.lane.b32.xlu0 %v448, 127
          %v451 = vpop.permute.xlu0 %450
          %452 = vrot.lane.b32.xlu0 %v444, 127
          %v453 = vpop.permute.xlu0 %452
          %454 = vrot.lane.b32.xlu0 %v449, 127
          %v455 = vpop.permute.xlu0 %454
          %456 = vrot.lane.b32.xlu0 %v445, 127
          %v457 = vpop.permute.xlu0 %456
          %vm458 = vcmask 1039360
          %v459 = vsel %vm458, %v451, %v453
          %v460 = vsel %vm458, %v453, %v455
          %v461 = vsel %vm458, %v455, %v457
          %465 = vst [vmem:[#allocation3] sm:$0xf0] %v459
          %466 = vst [vmem:[#allocation3 + $0x8] sm:$0xf0] %v460
          %467 = vst [vmem:[#allocation3 + $0x10] sm:$0xf0] %v461
          %v468 = vld [vmem:[#allocation2] sm:$0xff]
          %v469 = vld [vmem:[#allocation2 + $0x8] sm:$0xff]
          %v472 = vcombine.high %v468, %v468
          %v473 = vcombine.high %v469, %v469
          %474 = vrot.lane.b32.xlu0 %v468, 126
          %v475 = vpop.permute.xlu0 %474
          %476 = vrot.lane.b32.xlu0 %v472, 126
          %v477 = vpop.permute.xlu0 %476
          %478 = vrot.lane.b32.xlu0 %v469, 126
          %v479 = vpop.permute.xlu0 %478
          %480 = vrot.lane.b32.xlu0 %v473, 126
          %v481 = vpop.permute.xlu0 %480
          %vm482 = vcmask 1031168
          %v483 = vsel %vm482, %v475, %v477
          %v484 = vsel %vm482, %v477, %v479
          %v485 = vsel %vm482, %v479, %v481
          %489 = vst [vmem:[#allocation3 + $0x18] sm:$0xf] %v483
          %490 = vst [vmem:[#allocation3 + $0x20] sm:$0xf] %v484
          %491 = vst [vmem:[#allocation3 + $0x28] sm:$0xf] %v485
          %v492 = vld [vmem:[#allocation2] sm:$0xff]
          %v493 = vld [vmem:[#allocation2 + $0x8] sm:$0xff]
          %v496 = vcombine.low %v492, %v492
          %v497 = vcombine.low %v493, %v493
          %498 = vrot.lane.b32.xlu0 %v496, 110
          %v499 = vpop.permute.xlu0 %498
          %500 = vrot.lane.b32.xlu0 %v492, 110
          %v501 = vpop.permute.xlu0 %500
          %502 = vrot.lane.b32.xlu0 %v497, 110
          %v503 = vpop.permute.xlu0 %502
          %504 = vrot.lane.b32.xlu0 %v493, 110
          %v505 = vpop.permute.xlu0 %504
          %vm506 = vcmask 900096
          %v507 = vsel %vm506, %v499, %v501
          %v508 = vsel %vm506, %v501, %v503
          %v509 = vsel %vm506, %v503, %v505
          %513 = vst [vmem:[#allocation3 + $0x18] sm:$0xf0] %v507
          %514 = vst [vmem:[#allocation3 + $0x20] sm:$0xf0] %v508
          %515 = vst [vmem:[#allocation3 + $0x28] sm:$0xf0] %v509
          %v516 = vld [vmem:[#allocation2] sm:$0xff]
          %v517 = vld [vmem:[#allocation2 + $0x8] sm:$0xff]
          %v520 = vcombine.high %v516, %v516
          %v521 = vcombine.high %v517, %v517
          %522 = vrot.lane.b32.xlu0 %v516, 109
          %v523 = vpop.permute.xlu0 %522
          %524 = vrot.lane.b32.xlu0 %v520, 109
          %v525 = vpop.permute.xlu0 %524
          %526 = vrot.lane.b32.xlu0 %v517, 109
          %v527 = vpop.permute.xlu0 %526
          %528 = vrot.lane.b32.xlu0 %v521, 109
          %v529 = vpop.permute.xlu0 %528
          %vm530 = vcmask 891904
          %v531 = vsel %vm530, %v523, %v525
          %v532 = vsel %vm530, %v525, %v527
          %v533 = vsel %vm530, %v527, %v529
          %537 = vst [vmem:[#allocation3 + $0x30] sm:$0xf] %v531
          %538 = vst [vmem:[#allocation3 + $0x38] sm:$0xf] %v532
          %539 = vst [vmem:[#allocation3 + $0x40] sm:$0xf] %v533
          %v540 = vld [vmem:[#allocation2] sm:$0xff]
          %v541 = vld [vmem:[#allocation2 + $0x8] sm:$0xff]
          %v544 = vcombine.low %v540, %v540
          %v545 = vcombine.low %v541, %v541
          %546 = vrot.lane.b32.xlu0 %v544, 108
          %v547 = vpop.permute.xlu0 %546
          %548 = vrot.lane.b32.xlu0 %v540, 108
          %v549 = vpop.permute.xlu0 %548
          %550 = vrot.lane.b32.xlu0 %v545, 108
          %v551 = vpop.permute.xlu0 %550
          %552 = vrot.lane.b32.xlu0 %v541, 108
          %v553 = vpop.permute.xlu0 %552
          %vm554 = vcmask 883712
          %v555 = vsel %vm554, %v547, %v549
          %v556 = vsel %vm554, %v549, %v551
          %v557 = vsel %vm554, %v551, %v553
          %561 = vst [vmem:[#allocation3 + $0x30] sm:$0xf0] %v555
          %562 = vst [vmem:[#allocation3 + $0x38] sm:$0xf0] %v556
          %563 = vst [vmem:[#allocation3 + $0x40] sm:$0xf0] %v557
          %v564 = vld [vmem:[#allocation2] sm:$0xff]
          %v565 = vld [vmem:[#allocation2 + $0x8] sm:$0xff]
          %v568 = vcombine.high %v564, %v564
          %v569 = vcombine.high %v565, %v565
          %570 = vrot.lane.b32.xlu0 %v564, 92
          %v571 = vpop.permute.xlu0 %570
          %572 = vrot.lane.b32.xlu0 %v568, 92
          %v573 = vpop.permute.xlu0 %572
          %574 = vrot.lane.b32.xlu0 %v565, 92
          %v575 = vpop.permute.xlu0 %574
          %576 = vrot.lane.b32.xlu0 %v569, 92
          %v577 = vpop.permute.xlu0 %576
          %vm578 = vcmask 752640
          %v579 = vsel %vm578, %v571, %v573
          %v580 = vsel %vm578, %v573, %v575
          %v581 = vsel %vm578, %v575, %v577
          %585 = vst [vmem:[#allocation3 + $0x48] sm:$0xf] %v579
          %586 = vst [vmem:[#allocation3 + $0x50] sm:$0xf] %v580
          %587 = vst [vmem:[#allocation3 + $0x58] sm:$0xf] %v581
          %v588 = vld [vmem:[#allocation2] sm:$0xff]
          %v589 = vld [vmem:[#allocation2 + $0x8] sm:$0xff]
          %v592 = vcombine.low %v588, %v588
          %v593 = vcombine.low %v589, %v589
          %594 = vrot.lane.b32.xlu0 %v592, 91
          %v595 = vpop.permute.xlu0 %594
          %596 = vrot.lane.b32.xlu0 %v588, 91
          %v597 = vpop.permute.xlu0 %596
          %598 = vrot.lane.b32.xlu0 %v593, 91
          %v599 = vpop.permute.xlu0 %598
          %600 = vrot.lane.b32.xlu0 %v589, 91
          %v601 = vpop.permute.xlu0 %600
          %vm602 = vcmask 744448
          %v603 = vsel %vm602, %v595, %v597
          %v604 = vsel %vm602, %v597, %v599
          %v605 = vsel %vm602, %v599, %v601
          %609 = vst [vmem:[#allocation3 + $0x48] sm:$0xf0] %v603
          %610 = vst [vmem:[#allocation3 + $0x50] sm:$0xf0] %v604
          %611 = vst [vmem:[#allocation3 + $0x58] sm:$0xf0] %v605
          %v612 = vld [vmem:[#allocation2] sm:$0xff]
          %v613 = vld [vmem:[#allocation2 + $0x8] sm:$0xff]
          %v616 = vcombine.high %v612, %v612
          %v617 = vcombine.high %v613, %v613
          %618 = vrot.lane.b32.xlu0 %v612, 90
          %v619 = vpop.permute.xlu0 %618
          %620 = vrot.lane.b32.xlu0 %v616, 90
          %v621 = vpop.permute.xlu0 %620
          %622 = vrot.lane.b32.xlu0 %v613, 90
          %v623 = vpop.permute.xlu0 %622
          %624 = vrot.lane.b32.xlu0 %v617, 90
          %v625 = vpop.permute.xlu0 %624
          %vm626 = vcmask 736256
          %v627 = vsel %vm626, %v619, %v621
          %v628 = vsel %vm626, %v621, %v623
          %v629 = vsel %vm626, %v623, %v625
          %633 = vst [vmem:[#allocation3 + $0x60] sm:$0xf] %v627
          %634 = vst [vmem:[#allocation3 + $0x68] sm:$0xf] %v628
          %635 = vst [vmem:[#allocation3 + $0x70] sm:$0xf] %v629
        $region48: #{tpu_custom_call.1} parent=39 // pred_fallthru
          _
        %v636 = vld [vmem:[%s255] sm:$0x3]
        %v637 = vld [vmem:[#allocation3] sm:$0xff]
        %v638 = vld [vmem:[#allocation3 + $0x8] sm:$0xff]
        %v639 = vld [vmem:[#allocation3 + $0x10] sm:$0xff]
        %v640 = vld [vmem:[#allocation3 + $0x18] sm:$0xff]
        %v641 = vld [vmem:[#allocation3 + $0x20] sm:$0xff]
        %v642 = vld [vmem:[#allocation3 + $0x28] sm:$0xff]
        %v643 = vld [vmem:[#allocation3 + $0x30] sm:$0xff]
        %v644 = vld [vmem:[#allocation3 + $0x38] sm:$0xff]
        %v645 = vld [vmem:[#allocation3 + $0x40] sm:$0xff]
        %v646 = vld [vmem:[#allocation3 + $0x48] sm:$0xff]
        %v647 = vld [vmem:[#allocation3 + $0x50] sm:$0xff]
        %v648 = vld [vmem:[#allocation3 + $0x58] sm:$0xff]
        %v649 = vld [vmem:[#allocation3 + $0x60] sm:$0xf]
        %v650 = vld [vmem:[#allocation3 + $0x68] sm:$0xf]
        %v651 = vld [vmem:[#allocation3 + $0x70] sm:$0xf]
        %vm652 = vcmask 293888
        %v654 = vsel %vm652, %v636, 0
        %vm656 = vcmask 1043456
        %v658 = vsel %vm656, %v649, 0
        %v661 = vsel %vm656, %v650, 0
        %v664 = vsel %vm656, %v651, 0
        %666 = vmatprep.subr.mxu0 0.0
        %667 = vmatpush1.msra.mxu0 0.0
        %668 = vmatprep.subr.mxu0 0.0
        %669 = vmatpush1.msra.mxu0 0.0
        %670 = vmatprep.subr.mxu0 0.0
        %671 = vmatpush1.msra.mxu0 0.0
        %672 = vmatprep.subr.mxu0 0.0
        %673 = vmatpush1.msra.mxu0 0.0
        %674 = vmatprep.subr.mxu0 0.0
        %675 = vmatpush1.msra.mxu0 0.0
        %676 = vmatprep.subr.mxu0 0.0
        %677 = vmatpush1.msra.mxu0 0.0
        %678 = vmatprep.subr.mxu0 0.0
        %679 = vmatpush1.msra.mxu0 0.0
        %680 = vmatprep.subr.mxu0 0.0
        %681 = vmatpush1.msra.mxu0 0.0
        %682 = vmatprep.subr.mxu0 0.0
        %683 = vmatpush1.msra.mxu0 0.0
        %684 = vmatprep.subr.mxu0 0.0
        %685 = vmatpush1.msra.mxu0 0.0
        %686 = vmatprep.subr.mxu0 0.0
        %687 = vmatpush1.msra.mxu0 0.0
        %688 = vmatprep.subr.mxu0 %v661
        %689 = vmatpush1.msra.mxu0 %v658
        %690 = vmatprep.subr.mxu0 %v647
        %691 = vmatpush1.msra.mxu0 %v646
        %692 = vmatprep.subr.mxu0 %v644
        %693 = vmatpush1.msra.mxu0 %v643
        %694 = vmatprep.subr.mxu0 %v641
        %695 = vmatpush1.msra.mxu0 %v640
        %696 = vmatprep.subr.mxu0 %v638
        %697 = vmatpush1.msra.mxu0 %v637
        %698 = vmatprep.subr.mxu0 0.0
        %699 = vmatpush2.msra.mxu0 0.0
        %700 = vmatprep.subr.mxu0 0.0
        %701 = vmatpush2.msra.mxu0 0.0
        %702 = vmatprep.subr.mxu0 0.0
        %703 = vmatpush2.msra.mxu0 0.0
        %704 = vmatprep.subr.mxu0 0.0
        %705 = vmatpush2.msra.mxu0 0.0
        %706 = vmatprep.subr.mxu0 0.0
        %707 = vmatpush2.msra.mxu0 0.0
        %708 = vmatprep.subr.mxu0 0.0
        %709 = vmatpush2.msra.mxu0 0.0
        %710 = vmatprep.subr.mxu0 0.0
        %711 = vmatpush2.msra.mxu0 0.0
        %712 = vmatprep.subr.mxu0 0.0
        %713 = vmatpush2.msra.mxu0 0.0
        %714 = vmatprep.subr.mxu0 0.0
        %715 = vmatpush2.msra.mxu0 0.0
        %716 = vmatprep.subr.mxu0 0.0
        %717 = vmatpush2.msra.mxu0 0.0
        %718 = vmatprep.subr.mxu0 0.0
        %719 = vmatpush2.msra.mxu0 0.0
        %720 = vmatprep.subr.mxu0 0.0
        %721 = vmatpush2.msra.mxu0 0.0
        %722 = vmatprep.subr.mxu0 0.0
        %723 = vmatpush2.msra.mxu0 0.0
        %724 = vmatprep.subr.mxu0 0.0
        %725 = vmatpush2.msra.mxu0 0.0
        %726 = vmatprep.subr.mxu0 0.0
        %727 = vmatpush2.msra.mxu0 0.0
        %728 = vmatprep.subr.mxu0 0.0
        %729 = vmatpush2.msra.mxu0 0.0
        %730 = vmatprep.mubr.f32.mxu0 0.0
        %731 = vmatmul.mubr.f32.gmra.mxu0 %v654
        %v732 = vpop.f32.mrf.mxu0
        %v733 = vadd.f32 0.0, %v732
        %v734 = vpop.f32.mrf.mxu0
        %v735 = vadd.f32 0.0, %v734
        %736 = vdwg.mxu0
        %737 = vmatprep.subr.mxu0 0.0
        %738 = vmatpush1.msra.mxu0 0.0
        %739 = vmatprep.subr.mxu0 0.0
        %740 = vmatpush1.msra.mxu0 0.0
        %741 = vmatprep.subr.mxu0 0.0
        %742 = vmatpush1.msra.mxu0 0.0
        %743 = vmatprep.subr.mxu0 0.0
        %744 = vmatpush1.msra.mxu0 0.0
        %745 = vmatprep.subr.mxu0 0.0
        %746 = vmatpush1.msra.mxu0 0.0
        %747 = vmatprep.subr.mxu0 0.0
        %748 = vmatpush1.msra.mxu0 0.0
        %749 = vmatprep.subr.mxu0 0.0
        %750 = vmatpush1.msra.mxu0 0.0
        %751 = vmatprep.subr.mxu0 0.0
        %752 = vmatpush1.msra.mxu0 0.0
        %753 = vmatprep.subr.mxu0 0.0
        %754 = vmatpush1.msra.mxu0 0.0
        %755 = vmatprep.subr.mxu0 0.0
        %756 = vmatpush1.msra.mxu0 0.0
        %757 = vmatprep.subr.mxu0 0.0
        %758 = vmatpush1.msra.mxu0 0.0
        %759 = vmatprep.subr.mxu0 0.0
        %760 = vmatpush1.msra.mxu0 %v664
        %761 = vmatprep.subr.mxu0 0.0
        %762 = vmatpush1.msra.mxu0 %v648
        %763 = vmatprep.subr.mxu0 0.0
        %764 = vmatpush1.msra.mxu0 %v645
        %765 = vmatprep.subr.mxu0 0.0
        %766 = vmatpush1.msra.mxu0 %v642
        %767 = vmatprep.subr.mxu0 0.0
        %768 = vmatpush1.msra.mxu0 %v639
        %769 = vmatprep.subr.mxu0 0.0
        %770 = vmatpush2.msra.mxu0 0.0
        %771 = vmatprep.subr.mxu0 0.0
        %772 = vmatpush2.msra.mxu0 0.0
        %773 = vmatprep.subr.mxu0 0.0
        %774 = vmatpush2.msra.mxu0 0.0
        %775 = vmatprep.subr.mxu0 0.0
        %776 = vmatpush2.msra.mxu0 0.0
        %777 = vmatprep.subr.mxu0 0.0
        %778 = vmatpush2.msra.mxu0 0.0
        %779 = vmatprep.subr.mxu0 0.0
        %780 = vmatpush2.msra.mxu0 0.0
        %781 = vmatprep.subr.mxu0 0.0
        %782 = vmatpush2.msra.mxu0 0.0
        %783 = vmatprep.subr.mxu0 0.0
        %784 = vmatpush2.msra.mxu0 0.0
        %785 = vmatprep.subr.mxu0 0.0
        %786 = vmatpush2.msra.mxu0 0.0
        %787 = vmatprep.subr.mxu0 0.0
        %788 = vmatpush2.msra.mxu0 0.0
        %789 = vmatprep.subr.mxu0 0.0
        %790 = vmatpush2.msra.mxu0 0.0
        %791 = vmatprep.subr.mxu0 0.0
        %792 = vmatpush2.msra.mxu0 0.0
        %793 = vmatprep.subr.mxu0 0.0
        %794 = vmatpush2.msra.mxu0 0.0
        %795 = vmatprep.subr.mxu0 0.0
        %796 = vmatpush2.msra.mxu0 0.0
        %797 = vmatprep.subr.mxu0 0.0
        %798 = vmatpush2.msra.mxu0 0.0
        %799 = vmatprep.subr.mxu0 0.0
        %800 = vmatpush2.msra.mxu0 0.0
        %801 = vmatprep.mubr.f32.mxu0 0.0
        %802 = vmatmul.mubr.f32.gmra.mxu0 %v654
        %v803 = vpop.f32.mrf.mxu0
        %v804 = vadd.f32 0.0, %v803
        %v805 = vpop.f32.mrf.mxu0
        %806 = vdwg.mxu0
        %v807 = vld [vmem:[%s2] sm:$0x7]
        %v809 = vlaneseq
        %v810 = vshrl.u32 %v809, 7
        %v811 = vsub.s32 0, %v810
        %v812 = vrot.slane %v807, %v811
        %v813 = vlaneseq
        %v814 = vshrl.u32 %v813, 7
        %v815 = vsub.s32 1, %v814
        %v816 = vrot.slane %v807, %v815
        %v817 = vlaneseq
        %v818 = vshrl.u32 %v817, 7
        %v819 = vsub.s32 2, %v818
        %v820 = vrot.slane %v807, %v819
        %v824 = vmul.f32 %v733, %v812
        %v825 = vmul.f32 %v735, %v816
        %v826 = vmul.f32 %v804, %v820
        %vm827 = vcmask 1041408
        %v828 = vsel %vm827, %v824, 0.0
        %v829 = vsel %vm827, %v825, 0.0
        %v830 = vadd.f32 %v828, %v829
        %v831 = vsel %vm827, %v826, 0.0
        %v832 = vadd.f32 %v830, %v831
        %833 = vadd.xlane.f32.xlu0 %v832
        %v834 = vpop.xlane.xlu0 %833
        %v835 = vsel %vm827, %v834, 0.0
        %v836 = vrot.slane %v835, 4
        %v837 = vadd.f32 %v835, %v836
        %v838 = vrot.slane %v837, 2
        %v839 = vadd.f32 %v837, %v838
        %v840 = vrot.slane %v839, 1
        %v841 = vadd.f32 %v839, %v840
        %v842 = vmul.f32 %v841, 0.001953125
        %v843 = vsub.f32 %v733, %v842
        %v844 = vsub.f32 %v735, %v842
        %v845 = vsub.f32 %v804, %v842
        %v846 = vmul.f32 %v843, %v812
        %v847 = vmul.f32 %v844, %v816
        %v848 = vmul.f32 %v845, %v820
        %v849 = vmul.f32 %v846, %v846
        %v850 = vmul.f32 %v847, %v847
        %v851 = vmul.f32 %v848, %v848
        %v852 = vsel %vm827, %v849, 0.0
        %v853 = vsel %vm827, %v850, 0.0
        %v854 = vadd.f32 %v852, %v853
        %v855 = vsel %vm827, %v851, 0.0
        %v856 = vadd.f32 %v854, %v855
        %857 = vadd.xlane.f32.xlu0 %v856
        %v858 = vpop.xlane.xlu0 %857
        %v859 = vsel %vm827, %v858, 0.0
        %v860 = vrot.slane %v859, 4
        %v861 = vadd.f32 %v859, %v860
        %v862 = vrot.slane %v861, 2
        %v863 = vadd.f32 %v861, %v862
        %v864 = vrot.slane %v863, 1
        %v865 = vadd.f32 %v863, %v864
        %v866 = vmul.f32 %v865, 0.001953125
        %v867 = vadd.f32 %v866, 1e-05
        %v868 = vrsqrt.pop %v867
        %v869 = vld [vmem:[%s303] sm:$0x3]
        %v870 = vmul.f32 %v869, %v868
        %v871 = vld [vmem:[%s307] sm:$0x3]
        %v872 = vmul.f32 %v842, %v870
        %v873 = vsub.f32 %v871, %v872
        %875 = vset.pattern.permute.xlu0 0
        %876 = vperm.xlu0 %875, %v870
        %v877 = vpop.permute.xlu0 %876
        %v879 = vmul.f32 %v733, %v877
        %v880 = vmul.f32 %v735, %v877
        %v881 = vmul.f32 %v804, %v877
        %883 = vset.pattern.permute.xlu0 0
        %884 = vperm.xlu0 %883, %v873
        %v885 = vpop.permute.xlu0 %884
        %v887 = vadd.f32 %v879, %v885
        %v888 = vadd.f32 %v880, %v885
        %v889 = vadd.f32 %v881, %v885
        %v890 = vmax.f32 %v887, 0.0
        %v891 = vmax.f32 %v888, 0.0
        %v892 = vmax.f32 %v889, 0.0
        %vm893 = vcmask 123904
        %894 = vst.msk [vmem:[%s294] sm:$0x3] %vm893, %v890
        %v897 = vunpack.c.l.s4 1983009808
        %v898 = vunpack.c.0.s8 %v897
        %v899 = vlaneseq
        %v900 = vshrl.u32 %v899, 7
        %v901 = vsub.s32 %v898, %v900
        %v902 = vrot.slane %v890, %v901
        %903 = vrot.lane.b32.xlu0 %v902, 126
        %v904 = vpop.permute.xlu0 %903
        %vm906 = vcmask 255104
        %907 = vst.msk [vmem:[%s294] sm:$0x3] %vm906, %v904
        %908 = vrot.lane.b32.xlu0 %v902, 124
        %v909 = vpop.permute.xlu0 %908
        %vm911 = vcmask 386304
        %912 = vst.msk [vmem:[%s294] sm:$0x3] %vm911, %v909
        %913 = vrot.lane.b32.xlu0 %v902, 122
        %v914 = vpop.permute.xlu0 %913
        %vm916 = vcmask 517504
        %917 = vst.msk [vmem:[%s294] sm:$0x3] %vm916, %v914
        %918 = vrot.lane.b32.xlu0 %v902, 120
        %v919 = vpop.permute.xlu0 %918
        %vm921 = vcmask 648704
        %922 = vst.msk [vmem:[%s294] sm:$0x3] %vm921, %v919
        %923 = vrot.lane.b32.xlu0 %v902, 118
        %v924 = vpop.permute.xlu0 %923
        %vm926 = vcmask 779904
        %927 = vst.msk [vmem:[%s294] sm:$0x3] %vm926, %v924
        %928 = vrot.lane.b32.xlu0 %v902, 116
        %v929 = vpop.permute.xlu0 %928
        %vm931 = vcmask 911104
        %932 = vst.msk [vmem:[%s294] sm:$0x3] %vm931, %v929
        %v934 = vcombine.low %v890, %v891
        %v936 = vunpack.c.l.s4 1983009808
        %v937 = vunpack.c.0.s8 %v936
        %v938 = vlaneseq
        %v939 = vshrl.u32 %v938, 7
        %v940 = vsub.s32 %v937, %v939
        %v941 = vrot.slane %v934, %v940
        %942 = vrot.lane.b32.xlu0 %v941, 114
        %v943 = vpop.permute.xlu0 %942
        %v944 = vrot.slane %v943, 2
        %vm945 = vcmask 932864
        %v946 = vsel %vm945, %v943, %v944
        %vm948 = vcmask 1042304
        %949 = vst.msk [vmem:[%s294] sm:$0x3] %vm948, %v946
        %v951 = vunpack.c.l.s4 1983009808
        %v952 = vunpack.c.0.s8 %v951
        %v953 = vlaneseq
        %v954 = vshrl.u32 %v953, 7
        %v955 = vsub.s32 %v952, %v954
        %v956 = vrot.slane %v891, %v955
        %957 = vrot.lane.b32.xlu0 %v956, 112
        %v958 = vpop.permute.xlu0 %957
        %960 = vst.msk [vmem:[%s294 + $0x2] sm:$0x3] %vm893, %v958
        %961 = vrot.lane.b32.xlu0 %v956, 110
        %v962 = vpop.permute.xlu0 %961
        %964 = vst.msk [vmem:[%s294 + $0x2] sm:$0x3] %vm906, %v962
        %965 = vrot.lane.b32.xlu0 %v956, 108
        %v966 = vpop.permute.xlu0 %965
        %968 = vst.msk [vmem:[%s294 + $0x2] sm:$0x3] %vm911, %v966
        %969 = vrot.lane.b32.xlu0 %v956, 106
        %v970 = vpop.permute.xlu0 %969
        %972 = vst.msk [vmem:[%s294 + $0x2] sm:$0x3] %vm916, %v970
        %973 = vrot.lane.b32.xlu0 %v956, 104
        %v974 = vpop.permute.xlu0 %973
        %976 = vst.msk [vmem:[%s294 + $0x2] sm:$0x3] %vm921, %v974
        %977 = vrot.lane.b32.xlu0 %v956, 102
        %v978 = vpop.permute.xlu0 %977
        %980 = vst.msk [vmem:[%s294 + $0x2] sm:$0x3] %vm926, %v978
        %v982 = vcombine.low %v891, %v892
        %v984 = vunpack.c.l.s4 1983009808
        %v985 = vunpack.c.0.s8 %v984
        %v986 = vlaneseq
        %v987 = vshrl.u32 %v986, 7
        %v988 = vsub.s32 %v985, %v987
        %v989 = vrot.slane %v982, %v988
        %990 = vrot.lane.b32.xlu0 %v989, 100
        %v991 = vpop.permute.xlu0 %990
        %v992 = vrot.slane %v991, 2
        %vm993 = vcmask 818176
        %v994 = vsel %vm993, %v991, %v992
        %996 = vst.msk [vmem:[%s294 + $0x2] sm:$0x3] %vm931, %v994
        %v998 = vunpack.c.l.s4 1983009808
        %v999 = vunpack.c.0.s8 %v998
        %v1000 = vlaneseq
        %v1001 = vshrl.u32 %v1000, 7
        %v1002 = vsub.s32 %v999, %v1001
        %v1003 = vrot.slane %v892, %v1002
        %1004 = vrot.lane.b32.xlu0 %v1003, 98
        %v1005 = vpop.permute.xlu0 %1004
        %1007 = vst.msk [vmem:[%s294 + $0x2] sm:$0x3] %vm948, %v1005
        %s1008 = sand.u32 %s169, 1
        %s1009 = scalar_lea.sflag [#allocation6], %s1008
        %s1010 = sand.u32 %s169, 1
        %s1011 = smul.addr %s1010, 4
        %s1012 = scalar_lea.vmem [#allocation7], %s1011
        // Predicated region
        $region49: #{tpu_custom_call.1} parent=39 // pred_check
          %p1013 = pneg %p179
        $region50: #{tpu_custom_call.1} parent=39 // pred_check_branch
          %1015 = sbr.rel (%p1013) target = $region52
        $region51: #{tpu_custom_call.1} parent=39 // pred_region
          %s1017 = ssub.s32 64, 64
          %1018 = vsyncadd %s1009, %s1017
          %s1019 = smul.addr %s27, 2
          %s1020 = smul.addr %s26, 8
          %s1021 = sadd.s32 %s1019, %s1020
          %s1022 = smul.addr %s1021, 32
          %s1023 = scalar_lea.hbm %s5, %s1022
          %s1025 = sshll.u32 %s1012, 4
          %s1026 = int_to_ptr.vmem [resolvable:$true] %s1025
          %1028 = dma.vmem_to_hbm [thread:$0]  %s1026, 64, %s1023, %s1009
        $region52: #{tpu_custom_call.1} parent=39 // pred_fallthru
          _
      $region40: #{tpu_custom_call.1} parent=5 // pred_fallthru
        _
      %p1029 = scmp.le.s32.totalorder 2, %s17
      // Predicated region
      $region53: #{tpu_custom_call.1} parent=5 // pred_check
        %p1030 = pneg %p1029
      $region54: #{tpu_custom_call.1} parent=5 // pred_check_branch
        %1032 = sbr.rel (%p1030) target = $region56
      $region55: #{tpu_custom_call.1} parent=5 // pred_region
        %s1033 = ssub.s32 %s17, 2
        // Predicated region
        $region57: #{tpu_custom_call.1} parent=55 // pred_check
          %p1034 = pneg %p185
        $region58: #{tpu_custom_call.1} parent=55 // pred_check_branch
          %1036 = sbr.rel (%p1034) target = $region60
        $region59: #{tpu_custom_call.1} parent=55 // pred_region
          %s1037 = sand.u32 %s170, 1
          %s1038 = scalar_lea.sflag [#allocation6], %s1037
          %s1039 = sand.u32 %s170, 1
          %s1040 = smul.addr %s1039, 4
          %s1041 = scalar_lea.vmem [#allocation7], %s1040
          %1042 = dma.done %s1038, 64
        $region60: #{tpu_custom_call.1} parent=55 // pred_fallthru
          _
      $region56: #{tpu_custom_call.1} parent=5 // pred_fallthru
        _
    $region6: #{tpu_custom_call.1} parent=1 // loop_footer
      %s21 = sadd.s32 1, %s17
    $region7: #{tpu_custom_call.1} parent=1 // loop_footer_branch
      %16 = sbr.rel target = $region3
    $region8: #{tpu_custom_call.1} parent=1 // loop_exit
      _
    %1043 = vsyncpa [#allocation5], 1
    %s1044 = scalar_lea.sflag [#allocation5], 1
    %1045 = vsyncpa %s1044, 1
    %1046 = vsyncpa [#allocation6], 1
    %s1047 = scalar_lea.sflag [#allocation6], 1
    %1048 = vsyncpa %s1047, 1

</llo_original>
